<compile_context>
chip_gen: v7x
topology: tpu7x:2x2x1
jax: 0.10.0
libtpu: 0.0.40
codegen_flags: <defaults>
</compile_context>

<pallas_src>
import functools
import math

import jax
import jax.numpy as jnp
from jax.experimental import pallas as pl
from jax.experimental.pallas import tpu as pltpu


def mhsa_kernel(x_ref, wqkv_ref, bqkv_ref, wo_ref, bo_ref, o_ref, *,
                num_heads, head_dim):
    # x_ref block: (bt, S, D)
    bt, S, D = x_ref.shape
    nh, hd = num_heads, head_dim
    H = nh * hd
    scale = 1.0 / math.sqrt(hd)
    n = bt * S

    # (bt, S, D) -> (n, D): leading-dim merge only; lane dim unchanged.
    x2 = x_ref[...].reshape(n, D)

    # ONE fused QKV projection: single MXU push at 3*H output lanes + one bias
    # add.  wqkv_ref is (D, 3H) laid out [Wq | Wk | Wv], each block keeping the
    # original nn.Linear head order (head h -> lanes h*hd:(h+1)*hd).
    qkv = jnp.dot(x2, wqkv_ref[...],
                  preferred_element_type=jnp.float32) + bqkv_ref[...]   # (n, 3H)

    # Per-head attention.  Head split = static 8-lane slices (cheap XLU work);
    # each head runs a bt-batched attention at (S, hd) granularity, contracting
    # over head_dim directly (no explicit k transpose).
    ctx_heads = []
    for h in range(nh):                                   # static unroll, nh small
        qh = qkv[:, h * hd:(h + 1) * hd].reshape(bt, S, hd)
        kh = qkv[:, H + h * hd:H + (h + 1) * hd].reshape(bt, S, hd)
        vh = qkv[:, 2 * H + h * hd:2 * H + (h + 1) * hd].reshape(bt, S, hd)

        s = jnp.einsum('bqd,bkd->bqk', qh, kh,
                       preferred_element_type=jnp.float32) * scale      # (bt,S,S)
        s = s - jnp.max(s, axis=-1, keepdims=True)
        p = jnp.exp(s)
        p = p * pl.reciprocal(jnp.sum(p, axis=-1, keepdims=True), approx=True)

        ctx_h = jnp.einsum('bqk,bkd->bqd', p, vh,
                           preferred_element_type=jnp.float32)           # (bt,S,hd)
        ctx_heads.append(ctx_h.reshape(n, hd))

    # Lane-concat heads back into the nn.Linear context layout (n, H) and do
    # ONE output-projection matmul against the original Wo (H, D).
    ctx = jnp.concatenate(ctx_heads, axis=-1)                            # (n, H)
    out = jnp.dot(ctx, wo_ref[...],
                  preferred_element_type=jnp.float32) + bo_ref[...]      # (n, D)

    o_ref[...] = out.reshape(bt, S, D).astype(o_ref.dtype)


def pack_params(params):
    """Wrapper-side layout plumbing: fuse Q/K/V weights into one (D, 3H) matrix
    and the biases into one (1, 3H) row.  Wo/bo are passed through unchanged
    (the kernel reconstructs the concat-head context layout, so the original
    output projection applies directly)."""
    wq, bq, wk, bk, wv, bv, wo, bo = params
    wqkv = jnp.concatenate([wq, wk, wv], axis=-1)    # (D, 3H)
    bqkv = jnp.concatenate([bq, bk, bv], axis=-1)    # (1, 3H)
    return wqkv, bqkv, wo, bo


def multi_head_self_attention(x, params, *, num_heads, head_dim,
                              num_batch_blocks=1):
    """y = MHSA(x).  x: (B, S, D) = (batch, num_subvectors, subvector_dim).

    num_batch_blocks defaults to 1: at these sizes the grid is pure fixed cost
    on single-TC chips (v5e/v6e) and too small for v7x megacore to pay; raise
    it only when each block is several dense (8,128) tiles of real work."""
    B, S, D = x.shape
    H = num_heads * head_dim
    wqkv, bqkv, wo, bo = pack_params(params)

    assert B % num_batch_blocks == 0
    bt = B // num_batch_blocks

    kernel = functools.partial(mhsa_kernel, num_heads=num_heads,
                               head_dim=head_dim)

    def resident(shape):
        # Whole array resident in VMEM across grid steps (constant index_map).
        return pl.BlockSpec(shape, lambda b, _s=shape: (0,) * len(_s))

    return pl.pallas_call(
        kernel,
        out_shape=jax.ShapeDtypeStruct((B, S, D), x.dtype),
        grid_spec=pltpu.PrefetchScalarGridSpec(
            num_scalar_prefetch=0,
            grid=(num_batch_blocks,),
            in_specs=[
                pl.BlockSpec((bt, S, D), lambda b: (b, 0, 0)),   # x
                resident((D, 3 * H)),                            # fused QKV weight
                resident((1, 3 * H)),                            # fused QKV bias
                resident((H, D)),                                # Wo (original)
                resident((1, D)),                                # bo
            ],
            out_specs=pl.BlockSpec((bt, S, D), lambda b: (b, 0, 0)),
        ),
        compiler_params=pltpu.CompilerParams(
            dimension_semantics=("parallel",)),
    )(x, wqkv, bqkv, wo, bo)


def init_params(key, subvector_dim, hidden_dim, *, zero_output=True):
    """nn.Linear-style init (uniform +-1/sqrt(fan_in)).  The PyTorch module
    zeroes the output layer in __init__ (zero_output=True mirrors that); the
    test uses zero_output=False so the numerical check is meaningful."""
    ks = jax.random.split(key, 8)
    b_in = 1.0 / math.sqrt(subvector_dim)
    b_out = 1.0 / math.sqrt(hidden_dim)
    u = lambda k, shape, b: jax.random.uniform(k, shape, jnp.float32, -b, b)
    wq = u(ks[0], (subvector_dim, hidden_dim), b_in)
    bq = u(ks[1], (1, hidden_dim), b_in)
    wk = u(ks[2], (subvector_dim, hidden_dim), b_in)
    bk = u(ks[3], (1, hidden_dim), b_in)
    wv = u(ks[4], (subvector_dim, hidden_dim), b_in)
    bv = u(ks[5], (1, hidden_dim), b_in)
    if zero_output:
        wo = jnp.zeros((hidden_dim, subvector_dim), jnp.float32)
        bo = jnp.zeros((1, subvector_dim), jnp.float32)
    else:
        wo = u(ks[6], (hidden_dim, subvector_dim), b_out)
        bo = u(ks[7], (1, subvector_dim), b_out)
    return (wq, bq, wk, bk, wv, bv, wo, bo)


def reference_mhsa(x, params, *, num_heads, head_dim):
    """Pure-JAX reference mirroring the PyTorch forward."""
    wq, bq, wk, bk, wv, bv, wo, bo = params
    B, S, _ = x.shape
    H = num_heads * head_dim
    q = (x @ wq + bq).reshape(B, S, num_heads, head_dim).transpose(0, 2, 1, 3)
    k = (x @ wk + bk).reshape(B, S, num_heads, head_dim).transpose(0, 2, 1, 3)
    v = (x @ wv + bv).reshape(B, S, num_heads, head_dim).transpose(0, 2, 1, 3)
    scores = jnp.einsum("bhqd,bhkd->bhqk", q, k) / math.sqrt(head_dim)
    attn = jax.nn.softmax(scores, axis=-1)
    ctx = jnp.einsum("bhqk,bhkd->bhqd", attn, v)
    ctx = ctx.transpose(0, 2, 1, 3).reshape(B, S, H)
    return ctx @ wo + bo


if __name__ == "__main__":
    # Small shapes consistent with the module:
    # batch=2, num_subvectors=8, subvector_dim=16, hidden_dim=32, num_heads=4
    B, S, subvector_dim = 2, 8, 16
    hidden_dim, num_heads = 32, 4
    head_dim = hidden_dim // num_heads

    key = jax.random.PRNGKey(0)
    kx, kp = jax.random.split(key)
    x = jax.random.normal(kx, (B, S, subvector_dim), dtype=jnp.float32)
    # zero_output=False gives a non-trivial output projection so the check is
    # meaningful (the module's __init__ zeroes it, making the output all-zero).
    params = init_params(kp, subvector_dim, hidden_dim, zero_output=False)

    out = multi_head_self_attention(x, params, num_heads=num_heads,
                                    head_dim=head_dim)
    out = jax.block_until_ready(out)

    ref = reference_mhsa(x, params, num_heads=num_heads, head_dim=head_dim)
    assert out.shape == (B, S, subvector_dim)
    # tolerance loosened slightly for the approx-EUP reciprocal in the softmax
    assert jnp.allclose(out, ref, atol=2e-3, rtol=2e-3), \
        float(jnp.max(jnp.abs(out - ref)))

    print("KERNEL_OK")
</pallas_src>

<mosaic_0001>
module attributes {stable_mosaic.version = 11 : i64} {
  func.func @mhsa_kernel(%arg0: i32, %arg1: memref<2x8x16xf32, #tpu.memory_space<vmem>>, %arg2: memref<16x96xf32, #tpu.memory_space<vmem>>, %arg3: memref<1x96xf32, #tpu.memory_space<vmem>>, %arg4: memref<32x16xf32, #tpu.memory_space<vmem>>, %arg5: memref<1x16xf32, #tpu.memory_space<vmem>>, %arg6: memref<2x8x16xf32, #tpu.memory_space<vmem>>) attributes {dimension_semantics = [#tpu.dimension_semantics<parallel>], iteration_bounds = array<i64: 1>, scalar_prefetch = 0 : i64, scratch_operands = 0 : i64, tpu.core_type = #tpu.core_type<tc>, window_params = [{transform_indices = @transform_0, window_bounds = array<i64: 2, 8, 16>}, {pipeline_mode = #tpu.pipeline_mode<synchronous>, transform_indices = @transform_1, window_bounds = array<i64: 16, 96>}, {pipeline_mode = #tpu.pipeline_mode<synchronous>, transform_indices = @transform_2, window_bounds = array<i64: 1, 96>}, {pipeline_mode = #tpu.pipeline_mode<synchronous>, transform_indices = @transform_3, window_bounds = array<i64: 32, 16>}, {pipeline_mode = #tpu.pipeline_mode<synchronous>, transform_indices = @transform_4, window_bounds = array<i64: 1, 16>}, {transform_indices = @transform_5, window_bounds = array<i64: 2, 8, 16>}]} {
    %c0 = arith.constant 0 : index
    %c0_0 = arith.constant 0 : index
    %c0_1 = arith.constant 0 : index
    %0 = vector.load %arg1[%c0, %c0_0, %c0_1] : memref<2x8x16xf32, #tpu.memory_space<vmem>>, vector<2x8x16xf32>
    %1 = vector.shape_cast %0 : vector<2x8x16xf32> to vector<16x16xf32>
    %c0_2 = arith.constant 0 : index
    %c0_3 = arith.constant 0 : index
    %2 = vector.load %arg2[%c0_2, %c0_3] : memref<16x96xf32, #tpu.memory_space<vmem>>, vector<16x96xf32>
    %cst = arith.constant dense<0.000000e+00> : vector<16x96xf32>
    %3 = tpu.matmul %1, %2, %cst {dimension_numbers = #tpu.dot_dimension_numbers<[1], [0], [0], [1], [0, 0, 1, 1], [], []>} : vector<16x16xf32>, vector<16x96xf32>, vector<16x96xf32> -> vector<16x96xf32>
    %c0_4 = arith.constant 0 : index
    %c0_5 = arith.constant 0 : index
    %4 = vector.load %arg3[%c0_4, %c0_5] : memref<1x96xf32, #tpu.memory_space<vmem>>, vector<1x96xf32>
    %5 = vector.broadcast %4 : vector<1x96xf32> to vector<16x96xf32>
    %6 = arith.addf %3, %5 : vector<16x96xf32>
    %7 = vector.extract_strided_slice %6 {offsets = [0, 0], sizes = [16, 8], strides = [1, 1]} : vector<16x96xf32> to vector<16x8xf32>
    %8 = vector.shape_cast %7 : vector<16x8xf32> to vector<2x8x8xf32>
    %9 = vector.extract_strided_slice %6 {offsets = [0, 32], sizes = [16, 8], strides = [1, 1]} : vector<16x96xf32> to vector<16x8xf32>
    %10 = vector.shape_cast %9 : vector<16x8xf32> to vector<2x8x8xf32>
    %11 = vector.extract_strided_slice %6 {offsets = [0, 64], sizes = [16, 8], strides = [1, 1]} : vector<16x96xf32> to vector<16x8xf32>
    %12 = vector.shape_cast %11 : vector<16x8xf32> to vector<2x8x8xf32>
    "tpu.trace_start"() <{level = 10 : i32, message = "bqd,bkd->bqk"}> : () -> ()
    %cst_6 = arith.constant dense<0.000000e+00> : vector<2x8x8xf32>
    %13 = tpu.matmul %8, %10, %cst_6 {dimension_numbers = #tpu.dot_dimension_numbers<[2], [2], [1], [1], [0, 0, 0, 1, 1, 1], [0], [0]>} : vector<2x8x8xf32>, vector<2x8x8xf32>, vector<2x8x8xf32> -> vector<2x8x8xf32>
    "tpu.trace_stop"() : () -> ()
    %cst_7 = arith.constant 0.353553385 : f32
    %14 = vector.broadcast %cst_7 : f32 to vector<2x8x8xf32>
    %15 = arith.mulf %13, %14 : vector<2x8x8xf32>
    %cst_8 = arith.constant dense<0xFF800000> : vector<2x8xf32>
    %16 = vector.multi_reduction <maximumf>, %15, %cst_8 [2] : vector<2x8x8xf32> to vector<2x8xf32>
    %17 = vector.shape_cast %16 : vector<2x8xf32> to vector<2x8x1xf32>
    %18 = vector.broadcast %17 : vector<2x8x1xf32> to vector<2x8x8xf32>
    %19 = arith.subf %15, %18 : vector<2x8x8xf32>
    %20 = math.exp %19 : vector<2x8x8xf32>
    %cst_9 = arith.constant dense<0.000000e+00> : vector<2x8xf32>
    %21 = vector.multi_reduction <add>, %20, %cst_9 [2] : vector<2x8x8xf32> to vector<2x8xf32>
    %22 = vector.shape_cast %21 : vector<2x8xf32> to vector<2x8x1xf32>
    %23 = tpu.reciprocal %22 {approx = true} : vector<2x8x1xf32> -> vector<2x8x1xf32>
    %24 = vector.broadcast %23 : vector<2x8x1xf32> to vector<2x8x8xf32>
    %25 = arith.mulf %20, %24 : vector<2x8x8xf32>
    "tpu.trace_start"() <{level = 10 : i32, message = "bqk,bkd->bqd"}> : () -> ()
    %cst_10 = arith.constant dense<0.000000e+00> : vector<2x8x8xf32>
    %26 = tpu.matmul %25, %12, %cst_10 {dimension_numbers = #tpu.dot_dimension_numbers<[2], [1], [1], [2], [0, 0, 0, 1, 1, 2], [0], [0]>} : vector<2x8x8xf32>, vector<2x8x8xf32>, vector<2x8x8xf32> -> vector<2x8x8xf32>
    "tpu.trace_stop"() : () -> ()
    %27 = vector.shape_cast %26 : vector<2x8x8xf32> to vector<16x8xf32>
    %28 = vector.extract_strided_slice %6 {offsets = [0, 8], sizes = [16, 8], strides = [1, 1]} : vector<16x96xf32> to vector<16x8xf32>
    %29 = vector.shape_cast %28 : vector<16x8xf32> to vector<2x8x8xf32>
    %30 = vector.extract_strided_slice %6 {offsets = [0, 40], sizes = [16, 8], strides = [1, 1]} : vector<16x96xf32> to vector<16x8xf32>
    %31 = vector.shape_cast %30 : vector<16x8xf32> to vector<2x8x8xf32>
    %32 = vector.extract_strided_slice %6 {offsets = [0, 72], sizes = [16, 8], strides = [1, 1]} : vector<16x96xf32> to vector<16x8xf32>
    %33 = vector.shape_cast %32 : vector<16x8xf32> to vector<2x8x8xf32>
    "tpu.trace_start"() <{level = 10 : i32, message = "bqd,bkd->bqk"}> : () -> ()
    %cst_11 = arith.constant dense<0.000000e+00> : vector<2x8x8xf32>
    %34 = tpu.matmul %29, %31, %cst_11 {dimension_numbers = #tpu.dot_dimension_numbers<[2], [2], [1], [1], [0, 0, 0, 1, 1, 1], [0], [0]>} : vector<2x8x8xf32>, vector<2x8x8xf32>, vector<2x8x8xf32> -> vector<2x8x8xf32>
    "tpu.trace_stop"() : () -> ()
    %cst_12 = arith.constant 0.353553385 : f32
    %35 = vector.broadcast %cst_12 : f32 to vector<2x8x8xf32>
    %36 = arith.mulf %34, %35 : vector<2x8x8xf32>
    %cst_13 = arith.constant dense<0xFF800000> : vector<2x8xf32>
    %37 = vector.multi_reduction <maximumf>, %36, %cst_13 [2] : vector<2x8x8xf32> to vector<2x8xf32>
    %38 = vector.shape_cast %37 : vector<2x8xf32> to vector<2x8x1xf32>
    %39 = vector.broadcast %38 : vector<2x8x1xf32> to vector<2x8x8xf32>
    %40 = arith.subf %36, %39 : vector<2x8x8xf32>
    %41 = math.exp %40 : vector<2x8x8xf32>
    %cst_14 = arith.constant dense<0.000000e+00> : vector<2x8xf32>
    %42 = vector.multi_reduction <add>, %41, %cst_14 [2] : vector<2x8x8xf32> to vector<2x8xf32>
    %43 = vector.shape_cast %42 : vector<2x8xf32> to vector<2x8x1xf32>
    %44 = tpu.reciprocal %43 {approx = true} : vector<2x8x1xf32> -> vector<2x8x1xf32>
    %45 = vector.broadcast %44 : vector<2x8x1xf32> to vector<2x8x8xf32>
    %46 = arith.mulf %41, %45 : vector<2x8x8xf32>
    "tpu.trace_start"() <{level = 10 : i32, message = "bqk,bkd->bqd"}> : () -> ()
    %cst_15 = arith.constant dense<0.000000e+00> : vector<2x8x8xf32>
    %47 = tpu.matmul %46, %33, %cst_15 {dimension_numbers = #tpu.dot_dimension_numbers<[2], [1], [1], [2], [0, 0, 0, 1, 1, 2], [0], [0]>} : vector<2x8x8xf32>, vector<2x8x8xf32>, vector<2x8x8xf32> -> vector<2x8x8xf32>
    "tpu.trace_stop"() : () -> ()
    %48 = vector.shape_cast %47 : vector<2x8x8xf32> to vector<16x8xf32>
    %49 = vector.extract_strided_slice %6 {offsets = [0, 16], sizes = [16, 8], strides = [1, 1]} : vector<16x96xf32> to vector<16x8xf32>
    %50 = vector.shape_cast %49 : vector<16x8xf32> to vector<2x8x8xf32>
    %51 = vector.extract_strided_slice %6 {offsets = [0, 48], sizes = [16, 8], strides = [1, 1]} : vector<16x96xf32> to vector<16x8xf32>
    %52 = vector.shape_cast %51 : vector<16x8xf32> to vector<2x8x8xf32>
    %53 = vector.extract_strided_slice %6 {offsets = [0, 80], sizes = [16, 8], strides = [1, 1]} : vector<16x96xf32> to vector<16x8xf32>
    %54 = vector.shape_cast %53 : vector<16x8xf32> to vector<2x8x8xf32>
    "tpu.trace_start"() <{level = 10 : i32, message = "bqd,bkd->bqk"}> : () -> ()
    %cst_16 = arith.constant dense<0.000000e+00> : vector<2x8x8xf32>
    %55 = tpu.matmul %50, %52, %cst_16 {dimension_numbers = #tpu.dot_dimension_numbers<[2], [2], [1], [1], [0, 0, 0, 1, 1, 1], [0], [0]>} : vector<2x8x8xf32>, vector<2x8x8xf32>, vector<2x8x8xf32> -> vector<2x8x8xf32>
    "tpu.trace_stop"() : () -> ()
    %cst_17 = arith.constant 0.353553385 : f32
    %56 = vector.broadcast %cst_17 : f32 to vector<2x8x8xf32>
    %57 = arith.mulf %55, %56 : vector<2x8x8xf32>
    %cst_18 = arith.constant dense<0xFF800000> : vector<2x8xf32>
    %58 = vector.multi_reduction <maximumf>, %57, %cst_18 [2] : vector<2x8x8xf32> to vector<2x8xf32>
    %59 = vector.shape_cast %58 : vector<2x8xf32> to vector<2x8x1xf32>
    %60 = vector.broadcast %59 : vector<2x8x1xf32> to vector<2x8x8xf32>
    %61 = arith.subf %57, %60 : vector<2x8x8xf32>
    %62 = math.exp %61 : vector<2x8x8xf32>
    %cst_19 = arith.constant dense<0.000000e+00> : vector<2x8xf32>
    %63 = vector.multi_reduction <add>, %62, %cst_19 [2] : vector<2x8x8xf32> to vector<2x8xf32>
    %64 = vector.shape_cast %63 : vector<2x8xf32> to vector<2x8x1xf32>
    %65 = tpu.reciprocal %64 {approx = true} : vector<2x8x1xf32> -> vector<2x8x1xf32>
    %66 = vector.broadcast %65 : vector<2x8x1xf32> to vector<2x8x8xf32>
    %67 = arith.mulf %62, %66 : vector<2x8x8xf32>
    "tpu.trace_start"() <{level = 10 : i32, message = "bqk,bkd->bqd"}> : () -> ()
    %cst_20 = arith.constant dense<0.000000e+00> : vector<2x8x8xf32>
    %68 = tpu.matmul %67, %54, %cst_20 {dimension_numbers = #tpu.dot_dimension_numbers<[2], [1], [1], [2], [0, 0, 0, 1, 1, 2], [0], [0]>} : vector<2x8x8xf32>, vector<2x8x8xf32>, vector<2x8x8xf32> -> vector<2x8x8xf32>
    "tpu.trace_stop"() : () -> ()
    %69 = vector.shape_cast %68 : vector<2x8x8xf32> to vector<16x8xf32>
    %70 = vector.extract_strided_slice %6 {offsets = [0, 24], sizes = [16, 8], strides = [1, 1]} : vector<16x96xf32> to vector<16x8xf32>
    %71 = vector.shape_cast %70 : vector<16x8xf32> to vector<2x8x8xf32>
    %72 = vector.extract_strided_slice %6 {offsets = [0, 56], sizes = [16, 8], strides = [1, 1]} : vector<16x96xf32> to vector<16x8xf32>
    %73 = vector.shape_cast %72 : vector<16x8xf32> to vector<2x8x8xf32>
    %74 = vector.extract_strided_slice %6 {offsets = [0, 88], sizes = [16, 8], strides = [1, 1]} : vector<16x96xf32> to vector<16x8xf32>
    %75 = vector.shape_cast %74 : vector<16x8xf32> to vector<2x8x8xf32>
    "tpu.trace_start"() <{level = 10 : i32, message = "bqd,bkd->bqk"}> : () -> ()
    %cst_21 = arith.constant dense<0.000000e+00> : vector<2x8x8xf32>
    %76 = tpu.matmul %71, %73, %cst_21 {dimension_numbers = #tpu.dot_dimension_numbers<[2], [2], [1], [1], [0, 0, 0, 1, 1, 1], [0], [0]>} : vector<2x8x8xf32>, vector<2x8x8xf32>, vector<2x8x8xf32> -> vector<2x8x8xf32>
    "tpu.trace_stop"() : () -> ()
    %cst_22 = arith.constant 0.353553385 : f32
    %77 = vector.broadcast %cst_22 : f32 to vector<2x8x8xf32>
    %78 = arith.mulf %76, %77 : vector<2x8x8xf32>
    %cst_23 = arith.constant dense<0xFF800000> : vector<2x8xf32>
    %79 = vector.multi_reduction <maximumf>, %78, %cst_23 [2] : vector<2x8x8xf32> to vector<2x8xf32>
    %80 = vector.shape_cast %79 : vector<2x8xf32> to vector<2x8x1xf32>
    %81 = vector.broadcast %80 : vector<2x8x1xf32> to vector<2x8x8xf32>
    %82 = arith.subf %78, %81 : vector<2x8x8xf32>
    %83 = math.exp %82 : vector<2x8x8xf32>
    %cst_24 = arith.constant dense<0.000000e+00> : vector<2x8xf32>
    %84 = vector.multi_reduction <add>, %83, %cst_24 [2] : vector<2x8x8xf32> to vector<2x8xf32>
    %85 = vector.shape_cast %84 : vector<2x8xf32> to vector<2x8x1xf32>
    %86 = tpu.reciprocal %85 {approx = true} : vector<2x8x1xf32> -> vector<2x8x1xf32>
    %87 = vector.broadcast %86 : vector<2x8x1xf32> to vector<2x8x8xf32>
    %88 = arith.mulf %83, %87 : vector<2x8x8xf32>
    "tpu.trace_start"() <{level = 10 : i32, message = "bqk,bkd->bqd"}> : () -> ()
    %cst_25 = arith.constant dense<0.000000e+00> : vector<2x8x8xf32>
    %89 = tpu.matmul %88, %75, %cst_25 {dimension_numbers = #tpu.dot_dimension_numbers<[2], [1], [1], [2], [0, 0, 0, 1, 1, 2], [0], [0]>} : vector<2x8x8xf32>, vector<2x8x8xf32>, vector<2x8x8xf32> -> vector<2x8x8xf32>
    "tpu.trace_stop"() : () -> ()
    %90 = vector.shape_cast %89 : vector<2x8x8xf32> to vector<16x8xf32>
    %91 = tpu.concatenate %27, %48, %69, %90 in 1 : vector<16x8xf32>, vector<16x8xf32>, vector<16x8xf32>, vector<16x8xf32> -> vector<16x32xf32>
    %c0_26 = arith.constant 0 : index
    %c0_27 = arith.constant 0 : index
    %92 = vector.load %arg4[%c0_26, %c0_27] : memref<32x16xf32, #tpu.memory_space<vmem>>, vector<32x16xf32>
    %cst_28 = arith.constant dense<0.000000e+00> : vector<16x16xf32>
    %93 = tpu.matmul %91, %92, %cst_28 {dimension_numbers = #tpu.dot_dimension_numbers<[1], [0], [0], [1], [0, 0, 1, 1], [], []>} : vector<16x32xf32>, vector<32x16xf32>, vector<16x16xf32> -> vector<16x16xf32>
    %c0_29 = arith.constant 0 : index
    %c0_30 = arith.constant 0 : index
    %94 = vector.load %arg5[%c0_29, %c0_30] : memref<1x16xf32, #tpu.memory_space<vmem>>, vector<1x16xf32>
    %95 = vector.broadcast %94 : vector<1x16xf32> to vector<16x16xf32>
    %96 = arith.addf %93, %95 : vector<16x16xf32>
    %97 = vector.shape_cast %96 : vector<16x16xf32> to vector<2x8x16xf32>
    %c0_31 = arith.constant 0 : index
    %c0_32 = arith.constant 0 : index
    %c0_33 = arith.constant 0 : index
    %98 = vector.load %arg6[%c0_31, %c0_32, %c0_33] : memref<2x8x16xf32, #tpu.memory_space<vmem>>, vector<2x8x16xf32>
    tpu.vector_store %arg6[%c0_31, %c0_32, %c0_33], %97 {strides = array<i32>} : memref<2x8x16xf32, #tpu.memory_space<vmem>>, vector<2x8x16xf32>,
    return
  }
  func.func @transform_0(%arg0: i32) -> (i32, i32, i32) {
    %c0_i32 = arith.constant 0 : i32
    %c0_i32_0 = arith.constant 0 : i32
    %c0_i32_1 = arith.constant 0 : i32
    return %arg0, %c0_i32, %c0_i32_0 : i32, i32, i32
  }
  func.func @transform_1(%arg0: i32) -> (i32, i32) {
    %c0_i32 = arith.constant 0 : i32
    %c0_i32_0 = arith.constant 0 : i32
    %c0_i32_1 = arith.constant 0 : i32
    return %c0_i32, %c0_i32_0 : i32, i32
  }
  func.func @transform_2(%arg0: i32) -> (i32, i32) {
    %c0_i32 = arith.constant 0 : i32
    %c0_i32_0 = arith.constant 0 : i32
    %c0_i32_1 = arith.constant 0 : i32
    return %c0_i32, %c0_i32_0 : i32, i32
  }
  func.func @transform_3(%arg0: i32) -> (i32, i32) {
    %c0_i32 = arith.constant 0 : i32
    %c0_i32_0 = arith.constant 0 : i32
    %c0_i32_1 = arith.constant 0 : i32
    return %c0_i32, %c0_i32_0 : i32, i32
  }
  func.func @transform_4(%arg0: i32) -> (i32, i32) {
    %c0_i32 = arith.constant 0 : i32
    %c0_i32_0 = arith.constant 0 : i32
    %c0_i32_1 = arith.constant 0 : i32
    return %c0_i32, %c0_i32_0 : i32, i32
  }
  func.func @transform_5(%arg0: i32) -> (i32, i32, i32) {
    %c0_i32 = arith.constant 0 : i32
    %c0_i32_0 = arith.constant 0 : i32
    %c0_i32_1 = arith.constant 0 : i32
    return %arg0, %c0_i32, %c0_i32_0 : i32, i32, i32
  }
}

</mosaic_0001>

<llo_original>
// kernel: tpu_custom_call.1
$region0: #{tpu_custom_call.1}
  #allocation0 [shape = 'u32[]', space=smem, size = 0x4, offset = 0x4, fixed_abs, tag = 'smem constant byte address 0x4 - core index']
  #allocation1 [shape = 'u32[144,128]{1,0:T(1,128)}', space=vmem, size = 0x12000, scoped, tag = 'internal scratch']
  %s0 = inlined_call_operand.vmem [shape: f32[2,8,16], index: 0, kind: input, shape index: {}]
  %s1 = inlined_call_operand.vmem [shape: f32[16,96], index: 1, kind: input, shape index: {}]
  %s2 = inlined_call_operand.vmem [shape: f32[1,96], index: 2, kind: input, shape index: {}]
  %s3 = inlined_call_operand.vmem [shape: f32[32,16], index: 3, kind: input, shape index: {}]
  %s4 = inlined_call_operand.vmem [shape: f32[1,16], index: 4, kind: input, shape index: {}]
  %s5 = inlined_call_operand.hbm [shape: f32[2,8,16], index: 5, kind: output, shape index: {}]
  %s6 = sld [smem:[#allocation0]]
  $region30: #{tpu_custom_call.1} parent=0
    _
  %s8 = ssub.s32 1, %s6
  %s9 = scalar_select 0, %s8, %s6
  $region1: #{tpu_custom_call.1} parent=0
    #allocation2 [shape = 'u8[8192]{0}', space=vmem, size = 0x2000, scoped, tag = 'output window, operand 0, single buffered']
    #allocation3 [shape = 's32[1]{0}', space=sflag, size = 0x4, scoped, tag = 'scoped memory for tpu_custom_call.1']
    %10 = vsyncpa [#allocation3], 0
    // Predicated region
    $region2: #{tpu_custom_call.1} parent=1 // pred_check
      _
    $region3: #{tpu_custom_call.1} parent=1 // pred_check_branch
      %12 = sbr.rel (0) target = $region5
    $region4: #{tpu_custom_call.1} parent=1 // pred_region
      _
    $region5: #{tpu_custom_call.1} parent=1 // pred_fallthru
      _
    // Predicated region
    $region6: #{tpu_custom_call.1} parent=1 // pred_check
      _
    $region7: #{tpu_custom_call.1} parent=1 // pred_check_branch
      %14 = sbr.rel (0) target = $region9
    $region8: #{tpu_custom_call.1} parent=1 // pred_region
      _
    $region9: #{tpu_custom_call.1} parent=1 // pred_fallthru
      _
    // Predicated region
    $region10: #{tpu_custom_call.1} parent=1 // pred_check
      _
    $region11: #{tpu_custom_call.1} parent=1 // pred_check_branch
      %16 = sbr.rel (0) target = $region13
    $region12: #{tpu_custom_call.1} parent=1 // pred_region
      _
    $region13: #{tpu_custom_call.1} parent=1 // pred_fallthru
      _
    // Predicated region
    $region14: #{tpu_custom_call.1} parent=1 // pred_check
      _
    $region15: #{tpu_custom_call.1} parent=1 // pred_check_branch
      %18 = sbr.rel (0) target = $region17
    $region16: #{tpu_custom_call.1} parent=1 // pred_region
      _
    $region17: #{tpu_custom_call.1} parent=1 // pred_fallthru
      _
    // Predicated region
    $region18: #{tpu_custom_call.1} parent=1 // pred_check
      _
    $region19: #{tpu_custom_call.1} parent=1 // pred_check_branch
      %20 = sbr.rel (0) target = $region21
    $region20: #{tpu_custom_call.1} parent=1 // pred_region
      _
    $region21: #{tpu_custom_call.1} parent=1 // pred_fallthru
      _
    %v21 = vld [vmem:[%s0] sm:$0xff]
    %v22 = vld [vmem:[%s0 + $0x8] sm:$0xff]
    %v23 = vld [vmem:[%s1] sm:$0xff]
    %v24 = vld [vmem:[%s1 + $0x8] sm:$0xff]
    %v25 = vld [vmem:[%s2] sm:$0x1]
    %v27 = vlaneseq
    %v28 = vshrl.u32 %v27, 7
    %v29 = vsub.s32 0, %v28
    %v30 = vrot.slane %v25, %v29
    %vm32 = vcmask 130048
    %v34 = vsel %vm32, %v21, 0
    %v37 = vsel %vm32, %v22, 0
    %39 = vmatprep.subr.mxu0 0.0
    %40 = vmatpush1.msra.mxu0 %v23
    %41 = vmatprep.subr.mxu0 0.0
    %42 = vmatpush1.msra.mxu0 %v24
    %43 = vmatprep.subr.mxu0 0.0
    %44 = vmatpush1.msra.mxu0 0.0
    %45 = vmatprep.subr.mxu0 0.0
    %46 = vmatpush1.msra.mxu0 0.0
    %47 = vmatprep.subr.mxu0 0.0
    %48 = vmatpush1.msra.mxu0 0.0
    %49 = vmatprep.subr.mxu0 0.0
    %50 = vmatpush1.msra.mxu0 0.0
    %51 = vmatprep.subr.mxu0 0.0
    %52 = vmatpush1.msra.mxu0 0.0
    %53 = vmatprep.subr.mxu0 0.0
    %54 = vmatpush1.msra.mxu0 0.0
    %55 = vmatprep.subr.mxu0 0.0
    %56 = vmatpush1.msra.mxu0 0.0
    %57 = vmatprep.subr.mxu0 0.0
    %58 = vmatpush1.msra.mxu0 0.0
    %59 = vmatprep.subr.mxu0 0.0
    %60 = vmatpush1.msra.mxu0 0.0
    %61 = vmatprep.subr.mxu0 0.0
    %62 = vmatpush1.msra.mxu0 0.0
    %63 = vmatprep.subr.mxu0 0.0
    %64 = vmatpush1.msra.mxu0 0.0
    %65 = vmatprep.subr.mxu0 0.0
    %66 = vmatpush1.msra.mxu0 0.0
    %67 = vmatprep.subr.mxu0 0.0
    %68 = vmatpush1.msra.mxu0 0.0
    %69 = vmatprep.subr.mxu0 0.0
    %70 = vmatpush1.msra.mxu0 0.0
    %71 = vmatprep.subr.mxu0 0.0
    %72 = vmatpush1.msra.mxu0 0.0
    %73 = vmatprep.subr.mxu0 0.0
    %74 = vmatpush1.msra.mxu0 0.0
    %75 = vmatprep.subr.mxu0 0.0
    %76 = vmatpush1.msra.mxu0 0.0
    %77 = vmatprep.subr.mxu0 0.0
    %78 = vmatpush1.msra.mxu0 0.0
    %79 = vmatprep.subr.mxu0 0.0
    %80 = vmatpush1.msra.mxu0 0.0
    %81 = vmatprep.subr.mxu0 0.0
    %82 = vmatpush1.msra.mxu0 0.0
    %83 = vmatprep.subr.mxu0 0.0
    %84 = vmatpush1.msra.mxu0 0.0
    %85 = vmatprep.subr.mxu0 0.0
    %86 = vmatpush1.msra.mxu0 0.0
    %87 = vmatprep.subr.mxu0 0.0
    %88 = vmatpush1.msra.mxu0 0.0
    %89 = vmatprep.subr.mxu0 0.0
    %90 = vmatpush1.msra.mxu0 0.0
    %91 = vmatprep.subr.mxu0 0.0
    %92 = vmatpush1.msra.mxu0 0.0
    %93 = vmatprep.subr.mxu0 0.0
    %94 = vmatpush1.msra.mxu0 0.0
    %95 = vmatprep.subr.mxu0 0.0
    %96 = vmatpush1.msra.mxu0 0.0
    %97 = vmatprep.subr.mxu0 0.0
    %98 = vmatpush1.msra.mxu0 0.0
    %99 = vmatprep.subr.mxu0 0.0
    %100 = vmatpush1.msra.mxu0 0.0
    %101 = vmatprep.subr.mxu0 0.0
    %102 = vmatpush1.msra.mxu0 0.0
    %103 = vmatprep.mubr.f32.mxu0 0.0
    %104 = vmatmul.mubr.f32.gmra.mrb[0].mxu0 %v34
    %v105 = vpop.f32.mrb[0].mxu0
    %v106 = vadd.f32 %v30, %v105
    %v107 = vpop.f32.mrb[0].mxu0
    %108 = vmatprep.mubr.f32.mxu0 0.0
    %109 = vmatmul.mubr.f32.gmra.mrb[0].mxu0 %v37
    %v110 = vpop.f32.mrb[0].mxu0
    %v111 = vadd.f32 %v30, %v110
    %v112 = vpop.f32.mrb[0].mxu0
    %113 = vdwg.mxu0
    %115 = vrot.lane.b32.xlu0 %v106, 96
    %v116 = vpop.permute.xlu0 %115
    %vm117 = vcmask 64512
    %v118 = vsel %vm117, %v106, 0
    %v120 = vsel %vm117, %v116, 0
    %122 = vmatprep.subr.mxu0 0.0
    %123 = vmatpush1.xpose.msra.mxu0 %v120
    %124 = vmatprep.subr.mxu0 0.0
    %125 = vmatpush1.xpose.msra.mxu0 0.0
    %126 = vmatprep.subr.mxu0 0.0
    %127 = vmatpush1.xpose.msra.mxu0 0.0
    %128 = vmatprep.subr.mxu0 0.0
    %129 = vmatpush1.xpose.msra.mxu0 0.0
    %130 = vmatprep.subr.mxu0 0.0
    %131 = vmatpush1.xpose.msra.mxu0 0.0
    %132 = vmatprep.subr.mxu0 0.0
    %133 = vmatpush1.xpose.msra.mxu0 0.0
    %134 = vmatprep.subr.mxu0 0.0
    %135 = vmatpush1.xpose.msra.mxu0 0.0
    %136 = vmatprep.subr.mxu0 0.0
    %137 = vmatpush1.xpose.msra.mxu0 0.0
    %138 = vmatprep.subr.mxu0 0.0
    %139 = vmatpush1.xpose.msra.mxu0 0.0
    %140 = vmatprep.subr.mxu0 0.0
    %141 = vmatpush1.xpose.msra.mxu0 0.0
    %142 = vmatprep.subr.mxu0 0.0
    %143 = vmatpush1.xpose.msra.mxu0 0.0
    %144 = vmatprep.subr.mxu0 0.0
    %145 = vmatpush1.xpose.msra.mxu0 0.0
    %146 = vmatprep.subr.mxu0 0.0
    %147 = vmatpush1.xpose.msra.mxu0 0.0
    %148 = vmatprep.subr.mxu0 0.0
    %149 = vmatpush1.xpose.msra.mxu0 0.0
    %150 = vmatprep.subr.mxu0 0.0
    %151 = vmatpush1.xpose.msra.mxu0 0.0
    %152 = vmatprep.subr.mxu0 0.0
    %153 = vmatpush1.xpose.msra.mxu0 0.0
    %154 = vmatprep.subr.mxu0 0.0
    %155 = vmatpush1.xpose.msra.mxu0 0.0
    %156 = vmatprep.subr.mxu0 0.0
    %157 = vmatpush1.xpose.msra.mxu0 0.0
    %158 = vmatprep.subr.mxu0 0.0
    %159 = vmatpush1.xpose.msra.mxu0 0.0
    %160 = vmatprep.subr.mxu0 0.0
    %161 = vmatpush1.xpose.msra.mxu0 0.0
    %162 = vmatprep.subr.mxu0 0.0
    %163 = vmatpush1.xpose.msra.mxu0 0.0
    %164 = vmatprep.subr.mxu0 0.0
    %165 = vmatpush1.xpose.msra.mxu0 0.0
    %166 = vmatprep.subr.mxu0 0.0
    %167 = vmatpush1.xpose.msra.mxu0 0.0
    %168 = vmatprep.subr.mxu0 0.0
    %169 = vmatpush1.xpose.msra.mxu0 0.0
    %170 = vmatprep.subr.mxu0 0.0
    %171 = vmatpush1.xpose.msra.mxu0 0.0
    %172 = vmatprep.subr.mxu0 0.0
    %173 = vmatpush1.xpose.msra.mxu0 0.0
    %174 = vmatprep.subr.mxu0 0.0
    %175 = vmatpush1.xpose.msra.mxu0 0.0
    %176 = vmatprep.subr.mxu0 0.0
    %177 = vmatpush1.xpose.msra.mxu0 0.0
    %178 = vmatprep.subr.mxu0 0.0
    %179 = vmatpush1.xpose.msra.mxu0 0.0
    %180 = vmatprep.subr.mxu0 0.0
    %181 = vmatpush1.xpose.msra.mxu0 0.0
    %182 = vmatprep.subr.mxu0 0.0
    %183 = vmatpush1.xpose.msra.mxu0 0.0
    %184 = vmatprep.subr.mxu0 0.0
    %185 = vmatpush1.xpose.msra.mxu0 0.0
    %186 = vmatprep.mubr.f32.mxu0 0.0
    %187 = vmatmul.mubr.f32.gmra.mrb[0].mxu0 %v118
    %v188 = vpop.f32.mrb[0].mxu0
    %v189 = vadd.f32 0.0, %v188
    %v190 = vpop.f32.mrb[0].mxu0
    %191 = vdwg.mxu0
    %193 = vrot.lane.b32.xlu0 %v111, 96
    %v194 = vpop.permute.xlu0 %193
    %v195 = vsel %vm117, %v111, 0
    %v197 = vsel %vm117, %v194, 0
    %199 = vmatprep.subr.mxu0 0.0
    %200 = vmatpush1.xpose.msra.mxu0 %v197
    %201 = vmatprep.subr.mxu0 0.0
    %202 = vmatpush1.xpose.msra.mxu0 0.0
    %203 = vmatprep.subr.mxu0 0.0
    %204 = vmatpush1.xpose.msra.mxu0 0.0
    %205 = vmatprep.subr.mxu0 0.0
    %206 = vmatpush1.xpose.msra.mxu0 0.0
    %207 = vmatprep.subr.mxu0 0.0
    %208 = vmatpush1.xpose.msra.mxu0 0.0
    %209 = vmatprep.subr.mxu0 0.0
    %210 = vmatpush1.xpose.msra.mxu0 0.0
    %211 = vmatprep.subr.mxu0 0.0
    %212 = vmatpush1.xpose.msra.mxu0 0.0
    %213 = vmatprep.subr.mxu0 0.0
    %214 = vmatpush1.xpose.msra.mxu0 0.0
    %215 = vmatprep.subr.mxu0 0.0
    %216 = vmatpush1.xpose.msra.mxu0 0.0
    %217 = vmatprep.subr.mxu0 0.0
    %218 = vmatpush1.xpose.msra.mxu0 0.0
    %219 = vmatprep.subr.mxu0 0.0
    %220 = vmatpush1.xpose.msra.mxu0 0.0
    %221 = vmatprep.subr.mxu0 0.0
    %222 = vmatpush1.xpose.msra.mxu0 0.0
    %223 = vmatprep.subr.mxu0 0.0
    %224 = vmatpush1.xpose.msra.mxu0 0.0
    %225 = vmatprep.subr.mxu0 0.0
    %226 = vmatpush1.xpose.msra.mxu0 0.0
    %227 = vmatprep.subr.mxu0 0.0
    %228 = vmatpush1.xpose.msra.mxu0 0.0
    %229 = vmatprep.subr.mxu0 0.0
    %230 = vmatpush1.xpose.msra.mxu0 0.0
    %231 = vmatprep.subr.mxu0 0.0
    %232 = vmatpush1.xpose.msra.mxu0 0.0
    %233 = vmatprep.subr.mxu0 0.0
    %234 = vmatpush1.xpose.msra.mxu0 0.0
    %235 = vmatprep.subr.mxu0 0.0
    %236 = vmatpush1.xpose.msra.mxu0 0.0
    %237 = vmatprep.subr.mxu0 0.0
    %238 = vmatpush1.xpose.msra.mxu0 0.0
    %239 = vmatprep.subr.mxu0 0.0
    %240 = vmatpush1.xpose.msra.mxu0 0.0
    %241 = vmatprep.subr.mxu0 0.0
    %242 = vmatpush1.xpose.msra.mxu0 0.0
    %243 = vmatprep.subr.mxu0 0.0
    %244 = vmatpush1.xpose.msra.mxu0 0.0
    %245 = vmatprep.subr.mxu0 0.0
    %246 = vmatpush1.xpose.msra.mxu0 0.0
    %247 = vmatprep.subr.mxu0 0.0
    %248 = vmatpush1.xpose.msra.mxu0 0.0
    %249 = vmatprep.subr.mxu0 0.0
    %250 = vmatpush1.xpose.msra.mxu0 0.0
    %251 = vmatprep.subr.mxu0 0.0
    %252 = vmatpush1.xpose.msra.mxu0 0.0
    %253 = vmatprep.subr.mxu0 0.0
    %254 = vmatpush1.xpose.msra.mxu0 0.0
    %255 = vmatprep.subr.mxu0 0.0
    %256 = vmatpush1.xpose.msra.mxu0 0.0
    %257 = vmatprep.subr.mxu0 0.0
    %258 = vmatpush1.xpose.msra.mxu0 0.0
    %259 = vmatprep.subr.mxu0 0.0
    %260 = vmatpush1.xpose.msra.mxu0 0.0
    %261 = vmatprep.subr.mxu0 0.0
    %262 = vmatpush1.xpose.msra.mxu0 0.0
    %263 = vmatprep.mubr.f32.mxu0 0.0
    %264 = vmatmul.mubr.f32.gmra.mrb[0].mxu0 %v195
    %v265 = vpop.f32.mrb[0].mxu0
    %v266 = vadd.f32 0.0, %v265
    %v267 = vpop.f32.mrb[0].mxu0
    %268 = vdwg.mxu0
    %v269 = vmul.f32 %v189, 0.35355338
    %v270 = vmul.f32 %v266, 0.35355338
    %v271 = vsel %vm117, %v269, -inf
    %272 = vmax.xlane.f32.xlu0 %v271
    %v273 = vpop.xlane.xlu0 %272
    %v274 = vsel %vm117, %v270, -inf
    %275 = vmax.xlane.f32.xlu0 %v274
    %v276 = vpop.xlane.xlu0 %275
    %v277 = vsub.f32 %v269, %v273
    %v278 = vsub.f32 %v270, %v276
    %v279 = vmul.f32 %v277, 1.442695
    %v280 = vpow.pop %v279
    %v281 = vmul.f32 %v278, 1.442695
    %v282 = vpow.pop %v281
    %v283 = vsel %vm117, %v280, 0.0
    %284 = vadd.xlane.f32.xlu0 %v283
    %v285 = vpop.xlane.xlu0 %284
    %v286 = vsel %vm117, %v282, 0.0
    %287 = vadd.xlane.f32.xlu0 %v286
    %v288 = vpop.xlane.xlu0 %287
    %v289 = vrcp.pop %v285
    %v290 = vrcp.pop %v288
    %v291 = vmul.f32 %v280, %v289
    %v292 = vmul.f32 %v282, %v290
    %293 = vrot.lane.b32.xlu0 %v106, 64
    %v294 = vpop.permute.xlu0 %293
    %v297 = vsel %vm117, %v291, 0
    %299 = vmatprep.subr.mxu0 0.0
    %300 = vmatpush1.msra.mxu0 %v294
    %301 = vmatprep.subr.mxu0 0.0
    %302 = vmatpush1.msra.mxu0 0.0
    %303 = vmatprep.subr.mxu0 0.0
    %304 = vmatpush1.msra.mxu0 0.0
    %305 = vmatprep.subr.mxu0 0.0
    %306 = vmatpush1.msra.mxu0 0.0
    %307 = vmatprep.subr.mxu0 0.0
    %308 = vmatpush1.msra.mxu0 0.0
    %309 = vmatprep.subr.mxu0 0.0
    %310 = vmatpush1.msra.mxu0 0.0
    %311 = vmatprep.subr.mxu0 0.0
    %312 = vmatpush1.msra.mxu0 0.0
    %313 = vmatprep.subr.mxu0 0.0
    %314 = vmatpush1.msra.mxu0 0.0
    %315 = vmatprep.subr.mxu0 0.0
    %316 = vmatpush1.msra.mxu0 0.0
    %317 = vmatprep.subr.mxu0 0.0
    %318 = vmatpush1.msra.mxu0 0.0
    %319 = vmatprep.subr.mxu0 0.0
    %320 = vmatpush1.msra.mxu0 0.0
    %321 = vmatprep.subr.mxu0 0.0
    %322 = vmatpush1.msra.mxu0 0.0
    %323 = vmatprep.subr.mxu0 0.0
    %324 = vmatpush1.msra.mxu0 0.0
    %325 = vmatprep.subr.mxu0 0.0
    %326 = vmatpush1.msra.mxu0 0.0
    %327 = vmatprep.subr.mxu0 0.0
    %328 = vmatpush1.msra.mxu0 0.0
    %329 = vmatprep.subr.mxu0 0.0
    %330 = vmatpush1.msra.mxu0 0.0
    %331 = vmatprep.subr.mxu0 0.0
    %332 = vmatpush1.msra.mxu0 0.0
    %333 = vmatprep.subr.mxu0 0.0
    %334 = vmatpush1.msra.mxu0 0.0
    %335 = vmatprep.subr.mxu0 0.0
    %336 = vmatpush1.msra.mxu0 0.0
    %337 = vmatprep.subr.mxu0 0.0
    %338 = vmatpush1.msra.mxu0 0.0
    %339 = vmatprep.subr.mxu0 0.0
    %340 = vmatpush1.msra.mxu0 0.0
    %341 = vmatprep.subr.mxu0 0.0
    %342 = vmatpush1.msra.mxu0 0.0
    %343 = vmatprep.subr.mxu0 0.0
    %344 = vmatpush1.msra.mxu0 0.0
    %345 = vmatprep.subr.mxu0 0.0
    %346 = vmatpush1.msra.mxu0 0.0
    %347 = vmatprep.subr.mxu0 0.0
    %348 = vmatpush1.msra.mxu0 0.0
    %349 = vmatprep.subr.mxu0 0.0
    %350 = vmatpush1.msra.mxu0 0.0
    %351 = vmatprep.subr.mxu0 0.0
    %352 = vmatpush1.msra.mxu0 0.0
    %353 = vmatprep.subr.mxu0 0.0
    %354 = vmatpush1.msra.mxu0 0.0
    %355 = vmatprep.subr.mxu0 0.0
    %356 = vmatpush1.msra.mxu0 0.0
    %357 = vmatprep.subr.mxu0 0.0
    %358 = vmatpush1.msra.mxu0 0.0
    %359 = vmatprep.subr.mxu0 0.0
    %360 = vmatpush1.msra.mxu0 0.0
    %361 = vmatprep.subr.mxu0 0.0
    %362 = vmatpush1.msra.mxu0 0.0
    %363 = vmatprep.mubr.f32.mxu0 0.0
    %364 = vmatmul.mubr.f32.gmra.mrb[0].mxu0 %v297
    %v365 = vpop.f32.mrb[0].mxu0
    %v366 = vadd.f32 0.0, %v365
    %v367 = vpop.f32.mrb[0].mxu0
    %368 = vdwg.mxu0
    %369 = vrot.lane.b32.xlu0 %v111, 64
    %v370 = vpop.permute.xlu0 %369
    %v373 = vsel %vm117, %v292, 0
    %375 = vmatprep.subr.mxu0 0.0
    %376 = vmatpush1.msra.mxu0 %v370
    %377 = vmatprep.subr.mxu0 0.0
    %378 = vmatpush1.msra.mxu0 0.0
    %379 = vmatprep.subr.mxu0 0.0
    %380 = vmatpush1.msra.mxu0 0.0
    %381 = vmatprep.subr.mxu0 0.0
    %382 = vmatpush1.msra.mxu0 0.0
    %383 = vmatprep.subr.mxu0 0.0
    %384 = vmatpush1.msra.mxu0 0.0
    %385 = vmatprep.subr.mxu0 0.0
    %386 = vmatpush1.msra.mxu0 0.0
    %387 = vmatprep.subr.mxu0 0.0
    %388 = vmatpush1.msra.mxu0 0.0
    %389 = vmatprep.subr.mxu0 0.0
    %390 = vmatpush1.msra.mxu0 0.0
    %391 = vmatprep.subr.mxu0 0.0
    %392 = vmatpush1.msra.mxu0 0.0
    %393 = vmatprep.subr.mxu0 0.0
    %394 = vmatpush1.msra.mxu0 0.0
    %395 = vmatprep.subr.mxu0 0.0
    %396 = vmatpush1.msra.mxu0 0.0
    %397 = vmatprep.subr.mxu0 0.0
    %398 = vmatpush1.msra.mxu0 0.0
    %399 = vmatprep.subr.mxu0 0.0
    %400 = vmatpush1.msra.mxu0 0.0
    %401 = vmatprep.subr.mxu0 0.0
    %402 = vmatpush1.msra.mxu0 0.0
    %403 = vmatprep.subr.mxu0 0.0
    %404 = vmatpush1.msra.mxu0 0.0
    %405 = vmatprep.subr.mxu0 0.0
    %406 = vmatpush1.msra.mxu0 0.0
    %407 = vmatprep.subr.mxu0 0.0
    %408 = vmatpush1.msra.mxu0 0.0
    %409 = vmatprep.subr.mxu0 0.0
    %410 = vmatpush1.msra.mxu0 0.0
    %411 = vmatprep.subr.mxu0 0.0
    %412 = vmatpush1.msra.mxu0 0.0
    %413 = vmatprep.subr.mxu0 0.0
    %414 = vmatpush1.msra.mxu0 0.0
    %415 = vmatprep.subr.mxu0 0.0
    %416 = vmatpush1.msra.mxu0 0.0
    %417 = vmatprep.subr.mxu0 0.0
    %418 = vmatpush1.msra.mxu0 0.0
    %419 = vmatprep.subr.mxu0 0.0
    %420 = vmatpush1.msra.mxu0 0.0
    %421 = vmatprep.subr.mxu0 0.0
    %422 = vmatpush1.msra.mxu0 0.0
    %423 = vmatprep.subr.mxu0 0.0
    %424 = vmatpush1.msra.mxu0 0.0
    %425 = vmatprep.subr.mxu0 0.0
    %426 = vmatpush1.msra.mxu0 0.0
    %427 = vmatprep.subr.mxu0 0.0
    %428 = vmatpush1.msra.mxu0 0.0
    %429 = vmatprep.subr.mxu0 0.0
    %430 = vmatpush1.msra.mxu0 0.0
    %431 = vmatprep.subr.mxu0 0.0
    %432 = vmatpush1.msra.mxu0 0.0
    %433 = vmatprep.subr.mxu0 0.0
    %434 = vmatpush1.msra.mxu0 0.0
    %435 = vmatprep.subr.mxu0 0.0
    %436 = vmatpush1.msra.mxu0 0.0
    %437 = vmatprep.subr.mxu0 0.0
    %438 = vmatpush1.msra.mxu0 0.0
    %439 = vmatprep.mubr.f32.mxu0 0.0
    %440 = vmatmul.mubr.f32.gmra.mrb[0].mxu0 %v373
    %v441 = vpop.f32.mrb[0].mxu0
    %v442 = vadd.f32 0.0, %v441
    %v443 = vpop.f32.mrb[0].mxu0
    %444 = vdwg.mxu0
    %445 = vrot.lane.b32.xlu0 %v106, 120
    %v446 = vpop.permute.xlu0 %445
    %447 = vrot.lane.b32.xlu0 %v106, 88
    %v448 = vpop.permute.xlu0 %447
    %v449 = vsel %vm117, %v446, 0
    %v451 = vsel %vm117, %v448, 0
    %453 = vmatprep.subr.mxu0 0.0
    %454 = vmatpush1.xpose.msra.mxu0 %v451
    %455 = vmatprep.subr.mxu0 0.0
    %456 = vmatpush1.xpose.msra.mxu0 0.0
    %457 = vmatprep.subr.mxu0 0.0
    %458 = vmatpush1.xpose.msra.mxu0 0.0
    %459 = vmatprep.subr.mxu0 0.0
    %460 = vmatpush1.xpose.msra.mxu0 0.0
    %461 = vmatprep.subr.mxu0 0.0
    %462 = vmatpush1.xpose.msra.mxu0 0.0
    %463 = vmatprep.subr.mxu0 0.0
    %464 = vmatpush1.xpose.msra.mxu0 0.0
    %465 = vmatprep.subr.mxu0 0.0
    %466 = vmatpush1.xpose.msra.mxu0 0.0
    %467 = vmatprep.subr.mxu0 0.0
    %468 = vmatpush1.xpose.msra.mxu0 0.0
    %469 = vmatprep.subr.mxu0 0.0
    %470 = vmatpush1.xpose.msra.mxu0 0.0
    %471 = vmatprep.subr.mxu0 0.0
    %472 = vmatpush1.xpose.msra.mxu0 0.0
    %473 = vmatprep.subr.mxu0 0.0
    %474 = vmatpush1.xpose.msra.mxu0 0.0
    %475 = vmatprep.subr.mxu0 0.0
    %476 = vmatpush1.xpose.msra.mxu0 0.0
    %477 = vmatprep.subr.mxu0 0.0
    %478 = vmatpush1.xpose.msra.mxu0 0.0
    %479 = vmatprep.subr.mxu0 0.0
    %480 = vmatpush1.xpose.msra.mxu0 0.0
    %481 = vmatprep.subr.mxu0 0.0
    %482 = vmatpush1.xpose.msra.mxu0 0.0
    %483 = vmatprep.subr.mxu0 0.0
    %484 = vmatpush1.xpose.msra.mxu0 0.0
    %485 = vmatprep.subr.mxu0 0.0
    %486 = vmatpush1.xpose.msra.mxu0 0.0
    %487 = vmatprep.subr.mxu0 0.0
    %488 = vmatpush1.xpose.msra.mxu0 0.0
    %489 = vmatprep.subr.mxu0 0.0
    %490 = vmatpush1.xpose.msra.mxu0 0.0
    %491 = vmatprep.subr.mxu0 0.0
    %492 = vmatpush1.xpose.msra.mxu0 0.0
    %493 = vmatprep.subr.mxu0 0.0
    %494 = vmatpush1.xpose.msra.mxu0 0.0
    %495 = vmatprep.subr.mxu0 0.0
    %496 = vmatpush1.xpose.msra.mxu0 0.0
    %497 = vmatprep.subr.mxu0 0.0
    %498 = vmatpush1.xpose.msra.mxu0 0.0
    %499 = vmatprep.subr.mxu0 0.0
    %500 = vmatpush1.xpose.msra.mxu0 0.0
    %501 = vmatprep.subr.mxu0 0.0
    %502 = vmatpush1.xpose.msra.mxu0 0.0
    %503 = vmatprep.subr.mxu0 0.0
    %504 = vmatpush1.xpose.msra.mxu0 0.0
    %505 = vmatprep.subr.mxu0 0.0
    %506 = vmatpush1.xpose.msra.mxu0 0.0
    %507 = vmatprep.subr.mxu0 0.0
    %508 = vmatpush1.xpose.msra.mxu0 0.0
    %509 = vmatprep.subr.mxu0 0.0
    %510 = vmatpush1.xpose.msra.mxu0 0.0
    %511 = vmatprep.subr.mxu0 0.0
    %512 = vmatpush1.xpose.msra.mxu0 0.0
    %513 = vmatprep.subr.mxu0 0.0
    %514 = vmatpush1.xpose.msra.mxu0 0.0
    %515 = vmatprep.subr.mxu0 0.0
    %516 = vmatpush1.xpose.msra.mxu0 0.0
    %517 = vmatprep.mubr.f32.mxu0 0.0
    %518 = vmatmul.mubr.f32.gmra.mrb[0].mxu0 %v449
    %v519 = vpop.f32.mrb[0].mxu0
    %v520 = vadd.f32 0.0, %v519
    %v521 = vpop.f32.mrb[0].mxu0
    %522 = vdwg.mxu0
    %523 = vrot.lane.b32.xlu0 %v111, 120
    %v524 = vpop.permute.xlu0 %523
    %525 = vrot.lane.b32.xlu0 %v111, 88
    %v526 = vpop.permute.xlu0 %525
    %v527 = vsel %vm117, %v524, 0
    %v529 = vsel %vm117, %v526, 0
    %531 = vmatprep.subr.mxu0 0.0
    %532 = vmatpush1.xpose.msra.mxu0 %v529
    %533 = vmatprep.subr.mxu0 0.0
    %534 = vmatpush1.xpose.msra.mxu0 0.0
    %535 = vmatprep.subr.mxu0 0.0
    %536 = vmatpush1.xpose.msra.mxu0 0.0
    %537 = vmatprep.subr.mxu0 0.0
    %538 = vmatpush1.xpose.msra.mxu0 0.0
    %539 = vmatprep.subr.mxu0 0.0
    %540 = vmatpush1.xpose.msra.mxu0 0.0
    %541 = vmatprep.subr.mxu0 0.0
    %542 = vmatpush1.xpose.msra.mxu0 0.0
    %543 = vmatprep.subr.mxu0 0.0
    %544 = vmatpush1.xpose.msra.mxu0 0.0
    %545 = vmatprep.subr.mxu0 0.0
    %546 = vmatpush1.xpose.msra.mxu0 0.0
    %547 = vmatprep.subr.mxu0 0.0
    %548 = vmatpush1.xpose.msra.mxu0 0.0
    %549 = vmatprep.subr.mxu0 0.0
    %550 = vmatpush1.xpose.msra.mxu0 0.0
    %551 = vmatprep.subr.mxu0 0.0
    %552 = vmatpush1.xpose.msra.mxu0 0.0
    %553 = vmatprep.subr.mxu0 0.0
    %554 = vmatpush1.xpose.msra.mxu0 0.0
    %555 = vmatprep.subr.mxu0 0.0
    %556 = vmatpush1.xpose.msra.mxu0 0.0
    %557 = vmatprep.subr.mxu0 0.0
    %558 = vmatpush1.xpose.msra.mxu0 0.0
    %559 = vmatprep.subr.mxu0 0.0
    %560 = vmatpush1.xpose.msra.mxu0 0.0
    %561 = vmatprep.subr.mxu0 0.0
    %562 = vmatpush1.xpose.msra.mxu0 0.0
    %563 = vmatprep.subr.mxu0 0.0
    %564 = vmatpush1.xpose.msra.mxu0 0.0
    %565 = vmatprep.subr.mxu0 0.0
    %566 = vmatpush1.xpose.msra.mxu0 0.0
    %567 = vmatprep.subr.mxu0 0.0
    %568 = vmatpush1.xpose.msra.mxu0 0.0
    %569 = vmatprep.subr.mxu0 0.0
    %570 = vmatpush1.xpose.msra.mxu0 0.0
    %571 = vmatprep.subr.mxu0 0.0
    %572 = vmatpush1.xpose.msra.mxu0 0.0
    %573 = vmatprep.subr.mxu0 0.0
    %574 = vmatpush1.xpose.msra.mxu0 0.0
    %575 = vmatprep.subr.mxu0 0.0
    %576 = vmatpush1.xpose.msra.mxu0 0.0
    %577 = vmatprep.subr.mxu0 0.0
    %578 = vmatpush1.xpose.msra.mxu0 0.0
    %579 = vmatprep.subr.mxu0 0.0
    %580 = vmatpush1.xpose.msra.mxu0 0.0
    %581 = vmatprep.subr.mxu0 0.0
    %582 = vmatpush1.xpose.msra.mxu0 0.0
    %583 = vmatprep.subr.mxu0 0.0
    %584 = vmatpush1.xpose.msra.mxu0 0.0
    %585 = vmatprep.subr.mxu0 0.0
    %586 = vmatpush1.xpose.msra.mxu0 0.0
    %587 = vmatprep.subr.mxu0 0.0
    %588 = vmatpush1.xpose.msra.mxu0 0.0
    %589 = vmatprep.subr.mxu0 0.0
    %590 = vmatpush1.xpose.msra.mxu0 0.0
    %591 = vmatprep.subr.mxu0 0.0
    %592 = vmatpush1.xpose.msra.mxu0 0.0
    %593 = vmatprep.subr.mxu0 0.0
    %594 = vmatpush1.xpose.msra.mxu0 0.0
    %595 = vmatprep.mubr.f32.mxu0 0.0
    %596 = vmatmul.mubr.f32.gmra.mrb[0].mxu0 %v527
    %v597 = vpop.f32.mrb[0].mxu0
    %v598 = vadd.f32 0.0, %v597
    %v599 = vpop.f32.mrb[0].mxu0
    %600 = vdwg.mxu0
    %v601 = vmul.f32 %v520, 0.35355338
    %v602 = vmul.f32 %v598, 0.35355338
    %v603 = vsel %vm117, %v601, -inf
    %604 = vmax.xlane.f32.xlu0 %v603
    %v605 = vpop.xlane.xlu0 %604
    %v606 = vsel %vm117, %v602, -inf
    %607 = vmax.xlane.f32.xlu0 %v606
    %v608 = vpop.xlane.xlu0 %607
    %v609 = vsub.f32 %v601, %v605
    %v610 = vsub.f32 %v602, %v608
    %v611 = vmul.f32 %v609, 1.442695
    %v612 = vpow.pop %v611
    %v613 = vmul.f32 %v610, 1.442695
    %v614 = vpow.pop %v613
    %v615 = vsel %vm117, %v612, 0.0
    %616 = vadd.xlane.f32.xlu0 %v615
    %v617 = vpop.xlane.xlu0 %616
    %v618 = vsel %vm117, %v614, 0.0
    %619 = vadd.xlane.f32.xlu0 %v618
    %v620 = vpop.xlane.xlu0 %619
    %v621 = vrcp.pop %v617
    %v622 = vrcp.pop %v620
    %v623 = vmul.f32 %v612, %v621
    %v624 = vmul.f32 %v614, %v622
    %625 = vrot.lane.b32.xlu0 %v106, 56
    %v626 = vpop.permute.xlu0 %625
    %v629 = vsel %vm117, %v623, 0
    %631 = vmatprep.subr.mxu0 0.0
    %632 = vmatpush1.msra.mxu0 %v626
    %633 = vmatprep.subr.mxu0 0.0
    %634 = vmatpush1.msra.mxu0 0.0
    %635 = vmatprep.subr.mxu0 0.0
    %636 = vmatpush1.msra.mxu0 0.0
    %637 = vmatprep.subr.mxu0 0.0
    %638 = vmatpush1.msra.mxu0 0.0
    %639 = vmatprep.subr.mxu0 0.0
    %640 = vmatpush1.msra.mxu0 0.0
    %641 = vmatprep.subr.mxu0 0.0
    %642 = vmatpush1.msra.mxu0 0.0
    %643 = vmatprep.subr.mxu0 0.0
    %644 = vmatpush1.msra.mxu0 0.0
    %645 = vmatprep.subr.mxu0 0.0
    %646 = vmatpush1.msra.mxu0 0.0
    %647 = vmatprep.subr.mxu0 0.0
    %648 = vmatpush1.msra.mxu0 0.0
    %649 = vmatprep.subr.mxu0 0.0
    %650 = vmatpush1.msra.mxu0 0.0
    %651 = vmatprep.subr.mxu0 0.0
    %652 = vmatpush1.msra.mxu0 0.0
    %653 = vmatprep.subr.mxu0 0.0
    %654 = vmatpush1.msra.mxu0 0.0
    %655 = vmatprep.subr.mxu0 0.0
    %656 = vmatpush1.msra.mxu0 0.0
    %657 = vmatprep.subr.mxu0 0.0
    %658 = vmatpush1.msra.mxu0 0.0
    %659 = vmatprep.subr.mxu0 0.0
    %660 = vmatpush1.msra.mxu0 0.0
    %661 = vmatprep.subr.mxu0 0.0
    %662 = vmatpush1.msra.mxu0 0.0
    %663 = vmatprep.subr.mxu0 0.0
    %664 = vmatpush1.msra.mxu0 0.0
    %665 = vmatprep.subr.mxu0 0.0
    %666 = vmatpush1.msra.mxu0 0.0
    %667 = vmatprep.subr.mxu0 0.0
    %668 = vmatpush1.msra.mxu0 0.0
    %669 = vmatprep.subr.mxu0 0.0
    %670 = vmatpush1.msra.mxu0 0.0
    %671 = vmatprep.subr.mxu0 0.0
    %672 = vmatpush1.msra.mxu0 0.0
    %673 = vmatprep.subr.mxu0 0.0
    %674 = vmatpush1.msra.mxu0 0.0
    %675 = vmatprep.subr.mxu0 0.0
    %676 = vmatpush1.msra.mxu0 0.0
    %677 = vmatprep.subr.mxu0 0.0
    %678 = vmatpush1.msra.mxu0 0.0
    %679 = vmatprep.subr.mxu0 0.0
    %680 = vmatpush1.msra.mxu0 0.0
    %681 = vmatprep.subr.mxu0 0.0
    %682 = vmatpush1.msra.mxu0 0.0
    %683 = vmatprep.subr.mxu0 0.0
    %684 = vmatpush1.msra.mxu0 0.0
    %685 = vmatprep.subr.mxu0 0.0
    %686 = vmatpush1.msra.mxu0 0.0
    %687 = vmatprep.subr.mxu0 0.0
    %688 = vmatpush1.msra.mxu0 0.0
    %689 = vmatprep.subr.mxu0 0.0
    %690 = vmatpush1.msra.mxu0 0.0
    %691 = vmatprep.subr.mxu0 0.0
    %692 = vmatpush1.msra.mxu0 0.0
    %693 = vmatprep.subr.mxu0 0.0
    %694 = vmatpush1.msra.mxu0 0.0
    %695 = vmatprep.mubr.f32.mxu0 0.0
    %696 = vmatmul.mubr.f32.gmra.mrb[0].mxu0 %v629
    %v697 = vpop.f32.mrb[0].mxu0
    %v698 = vadd.f32 0.0, %v697
    %v699 = vpop.f32.mrb[0].mxu0
    %700 = vdwg.mxu0
    %701 = vrot.lane.b32.xlu0 %v111, 56
    %v702 = vpop.permute.xlu0 %701
    %v705 = vsel %vm117, %v624, 0
    %707 = vmatprep.subr.mxu0 0.0
    %708 = vmatpush1.msra.mxu0 %v702
    %709 = vmatprep.subr.mxu0 0.0
    %710 = vmatpush1.msra.mxu0 0.0
    %711 = vmatprep.subr.mxu0 0.0
    %712 = vmatpush1.msra.mxu0 0.0
    %713 = vmatprep.subr.mxu0 0.0
    %714 = vmatpush1.msra.mxu0 0.0
    %715 = vmatprep.subr.mxu0 0.0
    %716 = vmatpush1.msra.mxu0 0.0
    %717 = vmatprep.subr.mxu0 0.0
    %718 = vmatpush1.msra.mxu0 0.0
    %719 = vmatprep.subr.mxu0 0.0
    %720 = vmatpush1.msra.mxu0 0.0
    %721 = vmatprep.subr.mxu0 0.0
    %722 = vmatpush1.msra.mxu0 0.0
    %723 = vmatprep.subr.mxu0 0.0
    %724 = vmatpush1.msra.mxu0 0.0
    %725 = vmatprep.subr.mxu0 0.0
    %726 = vmatpush1.msra.mxu0 0.0
    %727 = vmatprep.subr.mxu0 0.0
    %728 = vmatpush1.msra.mxu0 0.0
    %729 = vmatprep.subr.mxu0 0.0
    %730 = vmatpush1.msra.mxu0 0.0
    %731 = vmatprep.subr.mxu0 0.0
    %732 = vmatpush1.msra.mxu0 0.0
    %733 = vmatprep.subr.mxu0 0.0
    %734 = vmatpush1.msra.mxu0 0.0
    %735 = vmatprep.subr.mxu0 0.0
    %736 = vmatpush1.msra.mxu0 0.0
    %737 = vmatprep.subr.mxu0 0.0
    %738 = vmatpush1.msra.mxu0 0.0
    %739 = vmatprep.subr.mxu0 0.0
    %740 = vmatpush1.msra.mxu0 0.0
    %741 = vmatprep.subr.mxu0 0.0
    %742 = vmatpush1.msra.mxu0 0.0
    %743 = vmatprep.subr.mxu0 0.0
    %744 = vmatpush1.msra.mxu0 0.0
    %745 = vmatprep.subr.mxu0 0.0
    %746 = vmatpush1.msra.mxu0 0.0
    %747 = vmatprep.subr.mxu0 0.0
    %748 = vmatpush1.msra.mxu0 0.0
    %749 = vmatprep.subr.mxu0 0.0
    %750 = vmatpush1.msra.mxu0 0.0
    %751 = vmatprep.subr.mxu0 0.0
    %752 = vmatpush1.msra.mxu0 0.0
    %753 = vmatprep.subr.mxu0 0.0
    %754 = vmatpush1.msra.mxu0 0.0
    %755 = vmatprep.subr.mxu0 0.0
    %756 = vmatpush1.msra.mxu0 0.0
    %757 = vmatprep.subr.mxu0 0.0
    %758 = vmatpush1.msra.mxu0 0.0
    %759 = vmatprep.subr.mxu0 0.0
    %760 = vmatpush1.msra.mxu0 0.0
    %761 = vmatprep.subr.mxu0 0.0
    %762 = vmatpush1.msra.mxu0 0.0
    %763 = vmatprep.subr.mxu0 0.0
    %764 = vmatpush1.msra.mxu0 0.0
    %765 = vmatprep.subr.mxu0 0.0
    %766 = vmatpush1.msra.mxu0 0.0
    %767 = vmatprep.subr.mxu0 0.0
    %768 = vmatpush1.msra.mxu0 0.0
    %769 = vmatprep.subr.mxu0 0.0
    %770 = vmatpush1.msra.mxu0 0.0
    %771 = vmatprep.mubr.f32.mxu0 0.0
    %772 = vmatmul.mubr.f32.gmra.mrb[0].mxu0 %v705
    %v773 = vpop.f32.mrb[0].mxu0
    %v774 = vadd.f32 0.0, %v773
    %v775 = vpop.f32.mrb[0].mxu0
    %776 = vdwg.mxu0
    %777 = vrot.lane.b32.xlu0 %v106, 112
    %v778 = vpop.permute.xlu0 %777
    %779 = vrot.lane.b32.xlu0 %v106, 80
    %v780 = vpop.permute.xlu0 %779
    %v781 = vsel %vm117, %v778, 0
    %v783 = vsel %vm117, %v780, 0
    %785 = vmatprep.subr.mxu0 0.0
    %786 = vmatpush1.xpose.msra.mxu0 %v783
    %787 = vmatprep.subr.mxu0 0.0
    %788 = vmatpush1.xpose.msra.mxu0 0.0
    %789 = vmatprep.subr.mxu0 0.0
    %790 = vmatpush1.xpose.msra.mxu0 0.0
    %791 = vmatprep.subr.mxu0 0.0
    %792 = vmatpush1.xpose.msra.mxu0 0.0
    %793 = vmatprep.subr.mxu0 0.0
    %794 = vmatpush1.xpose.msra.mxu0 0.0
    %795 = vmatprep.subr.mxu0 0.0
    %796 = vmatpush1.xpose.msra.mxu0 0.0
    %797 = vmatprep.subr.mxu0 0.0
    %798 = vmatpush1.xpose.msra.mxu0 0.0
    %799 = vmatprep.subr.mxu0 0.0
    %800 = vmatpush1.xpose.msra.mxu0 0.0
    %801 = vmatprep.subr.mxu0 0.0
    %802 = vmatpush1.xpose.msra.mxu0 0.0
    %803 = vmatprep.subr.mxu0 0.0
    %804 = vmatpush1.xpose.msra.mxu0 0.0
    %805 = vmatprep.subr.mxu0 0.0
    %806 = vmatpush1.xpose.msra.mxu0 0.0
    %807 = vmatprep.subr.mxu0 0.0
    %808 = vmatpush1.xpose.msra.mxu0 0.0
    %809 = vmatprep.subr.mxu0 0.0
    %810 = vmatpush1.xpose.msra.mxu0 0.0
    %811 = vmatprep.subr.mxu0 0.0
    %812 = vmatpush1.xpose.msra.mxu0 0.0
    %813 = vmatprep.subr.mxu0 0.0
    %814 = vmatpush1.xpose.msra.mxu0 0.0
    %815 = vmatprep.subr.mxu0 0.0
    %816 = vmatpush1.xpose.msra.mxu0 0.0
    %817 = vmatprep.subr.mxu0 0.0
    %818 = vmatpush1.xpose.msra.mxu0 0.0
    %819 = vmatprep.subr.mxu0 0.0
    %820 = vmatpush1.xpose.msra.mxu0 0.0
    %821 = vmatprep.subr.mxu0 0.0
    %822 = vmatpush1.xpose.msra.mxu0 0.0
    %823 = vmatprep.subr.mxu0 0.0
    %824 = vmatpush1.xpose.msra.mxu0 0.0
    %825 = vmatprep.subr.mxu0 0.0
    %826 = vmatpush1.xpose.msra.mxu0 0.0
    %827 = vmatprep.subr.mxu0 0.0
    %828 = vmatpush1.xpose.msra.mxu0 0.0
    %829 = vmatprep.subr.mxu0 0.0
    %830 = vmatpush1.xpose.msra.mxu0 0.0
    %831 = vmatprep.subr.mxu0 0.0
    %832 = vmatpush1.xpose.msra.mxu0 0.0
    %833 = vmatprep.subr.mxu0 0.0
    %834 = vmatpush1.xpose.msra.mxu0 0.0
    %835 = vmatprep.subr.mxu0 0.0
    %836 = vmatpush1.xpose.msra.mxu0 0.0
    %837 = vmatprep.subr.mxu0 0.0
    %838 = vmatpush1.xpose.msra.mxu0 0.0
    %839 = vmatprep.subr.mxu0 0.0
    %840 = vmatpush1.xpose.msra.mxu0 0.0
    %841 = vmatprep.subr.mxu0 0.0
    %842 = vmatpush1.xpose.msra.mxu0 0.0
    %843 = vmatprep.subr.mxu0 0.0
    %844 = vmatpush1.xpose.msra.mxu0 0.0
    %845 = vmatprep.subr.mxu0 0.0
    %846 = vmatpush1.xpose.msra.mxu0 0.0
    %847 = vmatprep.subr.mxu0 0.0
    %848 = vmatpush1.xpose.msra.mxu0 0.0
    %849 = vmatprep.mubr.f32.mxu0 0.0
    %850 = vmatmul.mubr.f32.gmra.mrb[0].mxu0 %v781
    %v851 = vpop.f32.mrb[0].mxu0
    %v852 = vadd.f32 0.0, %v851
    %v853 = vpop.f32.mrb[0].mxu0
    %854 = vdwg.mxu0
    %855 = vrot.lane.b32.xlu0 %v111, 112
    %v856 = vpop.permute.xlu0 %855
    %857 = vrot.lane.b32.xlu0 %v111, 80
    %v858 = vpop.permute.xlu0 %857
    %v859 = vsel %vm117, %v856, 0
    %v861 = vsel %vm117, %v858, 0
    %863 = vmatprep.subr.mxu0 0.0
    %864 = vmatpush1.xpose.msra.mxu0 %v861
    %865 = vmatprep.subr.mxu0 0.0
    %866 = vmatpush1.xpose.msra.mxu0 0.0
    %867 = vmatprep.subr.mxu0 0.0
    %868 = vmatpush1.xpose.msra.mxu0 0.0
    %869 = vmatprep.subr.mxu0 0.0
    %870 = vmatpush1.xpose.msra.mxu0 0.0
    %871 = vmatprep.subr.mxu0 0.0
    %872 = vmatpush1.xpose.msra.mxu0 0.0
    %873 = vmatprep.subr.mxu0 0.0
    %874 = vmatpush1.xpose.msra.mxu0 0.0
    %875 = vmatprep.subr.mxu0 0.0
    %876 = vmatpush1.xpose.msra.mxu0 0.0
    %877 = vmatprep.subr.mxu0 0.0
    %878 = vmatpush1.xpose.msra.mxu0 0.0
    %879 = vmatprep.subr.mxu0 0.0
    %880 = vmatpush1.xpose.msra.mxu0 0.0
    %881 = vmatprep.subr.mxu0 0.0
    %882 = vmatpush1.xpose.msra.mxu0 0.0
    %883 = vmatprep.subr.mxu0 0.0
    %884 = vmatpush1.xpose.msra.mxu0 0.0
    %885 = vmatprep.subr.mxu0 0.0
    %886 = vmatpush1.xpose.msra.mxu0 0.0
    %887 = vmatprep.subr.mxu0 0.0
    %888 = vmatpush1.xpose.msra.mxu0 0.0
    %889 = vmatprep.subr.mxu0 0.0
    %890 = vmatpush1.xpose.msra.mxu0 0.0
    %891 = vmatprep.subr.mxu0 0.0
    %892 = vmatpush1.xpose.msra.mxu0 0.0
    %893 = vmatprep.subr.mxu0 0.0
    %894 = vmatpush1.xpose.msra.mxu0 0.0
    %895 = vmatprep.subr.mxu0 0.0
    %896 = vmatpush1.xpose.msra.mxu0 0.0
    %897 = vmatprep.subr.mxu0 0.0
    %898 = vmatpush1.xpose.msra.mxu0 0.0
    %899 = vmatprep.subr.mxu0 0.0
    %900 = vmatpush1.xpose.msra.mxu0 0.0
    %901 = vmatprep.subr.mxu0 0.0
    %902 = vmatpush1.xpose.msra.mxu0 0.0
    %903 = vmatprep.subr.mxu0 0.0
    %904 = vmatpush1.xpose.msra.mxu0 0.0
    %905 = vmatprep.subr.mxu0 0.0
    %906 = vmatpush1.xpose.msra.mxu0 0.0
    %907 = vmatprep.subr.mxu0 0.0
    %908 = vmatpush1.xpose.msra.mxu0 0.0
    %909 = vmatprep.subr.mxu0 0.0
    %910 = vmatpush1.xpose.msra.mxu0 0.0
    %911 = vmatprep.subr.mxu0 0.0
    %912 = vmatpush1.xpose.msra.mxu0 0.0
    %913 = vmatprep.subr.mxu0 0.0
    %914 = vmatpush1.xpose.msra.mxu0 0.0
    %915 = vmatprep.subr.mxu0 0.0
    %916 = vmatpush1.xpose.msra.mxu0 0.0
    %917 = vmatprep.subr.mxu0 0.0
    %918 = vmatpush1.xpose.msra.mxu0 0.0
    %919 = vmatprep.subr.mxu0 0.0
    %920 = vmatpush1.xpose.msra.mxu0 0.0
    %921 = vmatprep.subr.mxu0 0.0
    %922 = vmatpush1.xpose.msra.mxu0 0.0
    %923 = vmatprep.subr.mxu0 0.0
    %924 = vmatpush1.xpose.msra.mxu0 0.0
    %925 = vmatprep.subr.mxu0 0.0
    %926 = vmatpush1.xpose.msra.mxu0 0.0
    %927 = vmatprep.mubr.f32.mxu0 0.0
    %928 = vmatmul.mubr.f32.gmra.mrb[0].mxu0 %v859
    %v929 = vpop.f32.mrb[0].mxu0
    %v930 = vadd.f32 0.0, %v929
    %v931 = vpop.f32.mrb[0].mxu0
    %932 = vdwg.mxu0
    %v933 = vmul.f32 %v852, 0.35355338
    %v934 = vmul.f32 %v930, 0.35355338
    %v935 = vsel %vm117, %v933, -inf
    %936 = vmax.xlane.f32.xlu0 %v935
    %v937 = vpop.xlane.xlu0 %936
    %v938 = vsel %vm117, %v934, -inf
    %939 = vmax.xlane.f32.xlu0 %v938
    %v940 = vpop.xlane.xlu0 %939
    %v941 = vsub.f32 %v933, %v937
    %v942 = vsub.f32 %v934, %v940
    %v943 = vmul.f32 %v941, 1.442695
    %v944 = vpow.pop %v943
    %v945 = vmul.f32 %v942, 1.442695
    %v946 = vpow.pop %v945
    %v947 = vsel %vm117, %v944, 0.0
    %948 = vadd.xlane.f32.xlu0 %v947
    %v949 = vpop.xlane.xlu0 %948
    %v950 = vsel %vm117, %v946, 0.0
    %951 = vadd.xlane.f32.xlu0 %v950
    %v952 = vpop.xlane.xlu0 %951
    %v953 = vrcp.pop %v949
    %v954 = vrcp.pop %v952
    %v955 = vmul.f32 %v944, %v953
    %v956 = vmul.f32 %v946, %v954
    %957 = vrot.lane.b32.xlu0 %v106, 48
    %v958 = vpop.permute.xlu0 %957
    %v961 = vsel %vm117, %v955, 0
    %963 = vmatprep.subr.mxu0 0.0
    %964 = vmatpush1.msra.mxu0 %v958
    %965 = vmatprep.subr.mxu0 0.0
    %966 = vmatpush1.msra.mxu0 0.0
    %967 = vmatprep.subr.mxu0 0.0
    %968 = vmatpush1.msra.mxu0 0.0
    %969 = vmatprep.subr.mxu0 0.0
    %970 = vmatpush1.msra.mxu0 0.0
    %971 = vmatprep.subr.mxu0 0.0
    %972 = vmatpush1.msra.mxu0 0.0
    %973 = vmatprep.subr.mxu0 0.0
    %974 = vmatpush1.msra.mxu0 0.0
    %975 = vmatprep.subr.mxu0 0.0
    %976 = vmatpush1.msra.mxu0 0.0
    %977 = vmatprep.subr.mxu0 0.0
    %978 = vmatpush1.msra.mxu0 0.0
    %979 = vmatprep.subr.mxu0 0.0
    %980 = vmatpush1.msra.mxu0 0.0
    %981 = vmatprep.subr.mxu0 0.0
    %982 = vmatpush1.msra.mxu0 0.0
    %983 = vmatprep.subr.mxu0 0.0
    %984 = vmatpush1.msra.mxu0 0.0
    %985 = vmatprep.subr.mxu0 0.0
    %986 = vmatpush1.msra.mxu0 0.0
    %987 = vmatprep.subr.mxu0 0.0
    %988 = vmatpush1.msra.mxu0 0.0
    %989 = vmatprep.subr.mxu0 0.0
    %990 = vmatpush1.msra.mxu0 0.0
    %991 = vmatprep.subr.mxu0 0.0
    %992 = vmatpush1.msra.mxu0 0.0
    %993 = vmatprep.subr.mxu0 0.0
    %994 = vmatpush1.msra.mxu0 0.0
    %995 = vmatprep.subr.mxu0 0.0
    %996 = vmatpush1.msra.mxu0 0.0
    %997 = vmatprep.subr.mxu0 0.0
    %998 = vmatpush1.msra.mxu0 0.0
    %999 = vmatprep.subr.mxu0 0.0
    %1000 = vmatpush1.msra.mxu0 0.0
    %1001 = vmatprep.subr.mxu0 0.0
    %1002 = vmatpush1.msra.mxu0 0.0
    %1003 = vmatprep.subr.mxu0 0.0
    %1004 = vmatpush1.msra.mxu0 0.0
    %1005 = vmatprep.subr.mxu0 0.0
    %1006 = vmatpush1.msra.mxu0 0.0
    %1007 = vmatprep.subr.mxu0 0.0
    %1008 = vmatpush1.msra.mxu0 0.0
    %1009 = vmatprep.subr.mxu0 0.0
    %1010 = vmatpush1.msra.mxu0 0.0
    %1011 = vmatprep.subr.mxu0 0.0
    %1012 = vmatpush1.msra.mxu0 0.0
    %1013 = vmatprep.subr.mxu0 0.0
    %1014 = vmatpush1.msra.mxu0 0.0
    %1015 = vmatprep.subr.mxu0 0.0
    %1016 = vmatpush1.msra.mxu0 0.0
    %1017 = vmatprep.subr.mxu0 0.0
    %1018 = vmatpush1.msra.mxu0 0.0
    %1019 = vmatprep.subr.mxu0 0.0
    %1020 = vmatpush1.msra.mxu0 0.0
    %1021 = vmatprep.subr.mxu0 0.0
    %1022 = vmatpush1.msra.mxu0 0.0
    %1023 = vmatprep.subr.mxu0 0.0
    %1024 = vmatpush1.msra.mxu0 0.0
    %1025 = vmatprep.subr.mxu0 0.0
    %1026 = vmatpush1.msra.mxu0 0.0
    %1027 = vmatprep.mubr.f32.mxu0 0.0
    %1028 = vmatmul.mubr.f32.gmra.mrb[0].mxu0 %v961
    %v1029 = vpop.f32.mrb[0].mxu0
    %v1030 = vadd.f32 0.0, %v1029
    %v1031 = vpop.f32.mrb[0].mxu0
    %1032 = vdwg.mxu0
    %1033 = vrot.lane.b32.xlu0 %v111, 48
    %v1034 = vpop.permute.xlu0 %1033
    %v1037 = vsel %vm117, %v956, 0
    %1039 = vmatprep.subr.mxu0 0.0
    %1040 = vmatpush1.msra.mxu0 %v1034
    %1041 = vmatprep.subr.mxu0 0.0
    %1042 = vmatpush1.msra.mxu0 0.0
    %1043 = vmatprep.subr.mxu0 0.0
    %1044 = vmatpush1.msra.mxu0 0.0
    %1045 = vmatprep.subr.mxu0 0.0
    %1046 = vmatpush1.msra.mxu0 0.0
    %1047 = vmatprep.subr.mxu0 0.0
    %1048 = vmatpush1.msra.mxu0 0.0
    %1049 = vmatprep.subr.mxu0 0.0
    %1050 = vmatpush1.msra.mxu0 0.0
    %1051 = vmatprep.subr.mxu0 0.0
    %1052 = vmatpush1.msra.mxu0 0.0
    %1053 = vmatprep.subr.mxu0 0.0
    %1054 = vmatpush1.msra.mxu0 0.0
    %1055 = vmatprep.subr.mxu0 0.0
    %1056 = vmatpush1.msra.mxu0 0.0
    %1057 = vmatprep.subr.mxu0 0.0
    %1058 = vmatpush1.msra.mxu0 0.0
    %1059 = vmatprep.subr.mxu0 0.0
    %1060 = vmatpush1.msra.mxu0 0.0
    %1061 = vmatprep.subr.mxu0 0.0
    %1062 = vmatpush1.msra.mxu0 0.0
    %1063 = vmatprep.subr.mxu0 0.0
    %1064 = vmatpush1.msra.mxu0 0.0
    %1065 = vmatprep.subr.mxu0 0.0
    %1066 = vmatpush1.msra.mxu0 0.0
    %1067 = vmatprep.subr.mxu0 0.0
    %1068 = vmatpush1.msra.mxu0 0.0
    %1069 = vmatprep.subr.mxu0 0.0
    %1070 = vmatpush1.msra.mxu0 0.0
    %1071 = vmatprep.subr.mxu0 0.0
    %1072 = vmatpush1.msra.mxu0 0.0
    %1073 = vmatprep.subr.mxu0 0.0
    %1074 = vmatpush1.msra.mxu0 0.0
    %1075 = vmatprep.subr.mxu0 0.0
    %1076 = vmatpush1.msra.mxu0 0.0
    %1077 = vmatprep.subr.mxu0 0.0
    %1078 = vmatpush1.msra.mxu0 0.0
    %1079 = vmatprep.subr.mxu0 0.0
    %1080 = vmatpush1.msra.mxu0 0.0
    %1081 = vmatprep.subr.mxu0 0.0
    %1082 = vmatpush1.msra.mxu0 0.0
    %1083 = vmatprep.subr.mxu0 0.0
    %1084 = vmatpush1.msra.mxu0 0.0
    %1085 = vmatprep.subr.mxu0 0.0
    %1086 = vmatpush1.msra.mxu0 0.0
    %1087 = vmatprep.subr.mxu0 0.0
    %1088 = vmatpush1.msra.mxu0 0.0
    %1089 = vmatprep.subr.mxu0 0.0
    %1090 = vmatpush1.msra.mxu0 0.0
    %1091 = vmatprep.subr.mxu0 0.0
    %1092 = vmatpush1.msra.mxu0 0.0
    %1093 = vmatprep.subr.mxu0 0.0
    %1094 = vmatpush1.msra.mxu0 0.0
    %1095 = vmatprep.subr.mxu0 0.0
    %1096 = vmatpush1.msra.mxu0 0.0
    %1097 = vmatprep.subr.mxu0 0.0
    %1098 = vmatpush1.msra.mxu0 0.0
    %1099 = vmatprep.subr.mxu0 0.0
    %1100 = vmatpush1.msra.mxu0 0.0
    %1101 = vmatprep.subr.mxu0 0.0
    %1102 = vmatpush1.msra.mxu0 0.0
    %1103 = vmatprep.mubr.f32.mxu0 0.0
    %1104 = vmatmul.mubr.f32.gmra.mrb[0].mxu0 %v1037
    %v1105 = vpop.f32.mrb[0].mxu0
    %v1106 = vadd.f32 0.0, %v1105
    %v1107 = vpop.f32.mrb[0].mxu0
    %1108 = vdwg.mxu0
    %1109 = vrot.lane.b32.xlu0 %v106, 104
    %v1110 = vpop.permute.xlu0 %1109
    %1111 = vrot.lane.b32.xlu0 %v106, 72
    %v1112 = vpop.permute.xlu0 %1111
    %v1113 = vsel %vm117, %v1110, 0
    %v1115 = vsel %vm117, %v1112, 0
    %1117 = vmatprep.subr.mxu0 0.0
    %1118 = vmatpush1.xpose.msra.mxu0 %v1115
    %1119 = vmatprep.subr.mxu0 0.0
    %1120 = vmatpush1.xpose.msra.mxu0 0.0
    %1121 = vmatprep.subr.mxu0 0.0
    %1122 = vmatpush1.xpose.msra.mxu0 0.0
    %1123 = vmatprep.subr.mxu0 0.0
    %1124 = vmatpush1.xpose.msra.mxu0 0.0
    %1125 = vmatprep.subr.mxu0 0.0
    %1126 = vmatpush1.xpose.msra.mxu0 0.0
    %1127 = vmatprep.subr.mxu0 0.0
    %1128 = vmatpush1.xpose.msra.mxu0 0.0
    %1129 = vmatprep.subr.mxu0 0.0
    %1130 = vmatpush1.xpose.msra.mxu0 0.0
    %1131 = vmatprep.subr.mxu0 0.0
    %1132 = vmatpush1.xpose.msra.mxu0 0.0
    %1133 = vmatprep.subr.mxu0 0.0
    %1134 = vmatpush1.xpose.msra.mxu0 0.0
    %1135 = vmatprep.subr.mxu0 0.0
    %1136 = vmatpush1.xpose.msra.mxu0 0.0
    %1137 = vmatprep.subr.mxu0 0.0
    %1138 = vmatpush1.xpose.msra.mxu0 0.0
    %1139 = vmatprep.subr.mxu0 0.0
    %1140 = vmatpush1.xpose.msra.mxu0 0.0
    %1141 = vmatprep.subr.mxu0 0.0
    %1142 = vmatpush1.xpose.msra.mxu0 0.0
    %1143 = vmatprep.subr.mxu0 0.0
    %1144 = vmatpush1.xpose.msra.mxu0 0.0
    %1145 = vmatprep.subr.mxu0 0.0
    %1146 = vmatpush1.xpose.msra.mxu0 0.0
    %1147 = vmatprep.subr.mxu0 0.0
    %1148 = vmatpush1.xpose.msra.mxu0 0.0
    %1149 = vmatprep.subr.mxu0 0.0
    %1150 = vmatpush1.xpose.msra.mxu0 0.0
    %1151 = vmatprep.subr.mxu0 0.0
    %1152 = vmatpush1.xpose.msra.mxu0 0.0
    %1153 = vmatprep.subr.mxu0 0.0
    %1154 = vmatpush1.xpose.msra.mxu0 0.0
    %1155 = vmatprep.subr.mxu0 0.0
    %1156 = vmatpush1.xpose.msra.mxu0 0.0
    %1157 = vmatprep.subr.mxu0 0.0
    %1158 = vmatpush1.xpose.msra.mxu0 0.0
    %1159 = vmatprep.subr.mxu0 0.0
    %1160 = vmatpush1.xpose.msra.mxu0 0.0
    %1161 = vmatprep.subr.mxu0 0.0
    %1162 = vmatpush1.xpose.msra.mxu0 0.0
    %1163 = vmatprep.subr.mxu0 0.0
    %1164 = vmatpush1.xpose.msra.mxu0 0.0
    %1165 = vmatprep.subr.mxu0 0.0
    %1166 = vmatpush1.xpose.msra.mxu0 0.0
    %1167 = vmatprep.subr.mxu0 0.0
    %1168 = vmatpush1.xpose.msra.mxu0 0.0
    %1169 = vmatprep.subr.mxu0 0.0
    %1170 = vmatpush1.xpose.msra.mxu0 0.0
    %1171 = vmatprep.subr.mxu0 0.0
    %1172 = vmatpush1.xpose.msra.mxu0 0.0
    %1173 = vmatprep.subr.mxu0 0.0
    %1174 = vmatpush1.xpose.msra.mxu0 0.0
    %1175 = vmatprep.subr.mxu0 0.0
    %1176 = vmatpush1.xpose.msra.mxu0 0.0
    %1177 = vmatprep.subr.mxu0 0.0
    %1178 = vmatpush1.xpose.msra.mxu0 0.0
    %1179 = vmatprep.subr.mxu0 0.0
    %1180 = vmatpush1.xpose.msra.mxu0 0.0
    %1181 = vmatprep.mubr.f32.mxu0 0.0
    %1182 = vmatmul.mubr.f32.gmra.mrb[0].mxu0 %v1113
    %v1183 = vpop.f32.mrb[0].mxu0
    %v1184 = vadd.f32 0.0, %v1183
    %v1185 = vpop.f32.mrb[0].mxu0
    %1186 = vdwg.mxu0
    %1187 = vrot.lane.b32.xlu0 %v111, 104
    %v1188 = vpop.permute.xlu0 %1187
    %1189 = vrot.lane.b32.xlu0 %v111, 72
    %v1190 = vpop.permute.xlu0 %1189
    %v1191 = vsel %vm117, %v1188, 0
    %v1193 = vsel %vm117, %v1190, 0
    %1195 = vmatprep.subr.mxu0 0.0
    %1196 = vmatpush1.xpose.msra.mxu0 %v1193
    %1197 = vmatprep.subr.mxu0 0.0
    %1198 = vmatpush1.xpose.msra.mxu0 0.0
    %1199 = vmatprep.subr.mxu0 0.0
    %1200 = vmatpush1.xpose.msra.mxu0 0.0
    %1201 = vmatprep.subr.mxu0 0.0
    %1202 = vmatpush1.xpose.msra.mxu0 0.0
    %1203 = vmatprep.subr.mxu0 0.0
    %1204 = vmatpush1.xpose.msra.mxu0 0.0
    %1205 = vmatprep.subr.mxu0 0.0
    %1206 = vmatpush1.xpose.msra.mxu0 0.0
    %1207 = vmatprep.subr.mxu0 0.0
    %1208 = vmatpush1.xpose.msra.mxu0 0.0
    %1209 = vmatprep.subr.mxu0 0.0
    %1210 = vmatpush1.xpose.msra.mxu0 0.0
    %1211 = vmatprep.subr.mxu0 0.0
    %1212 = vmatpush1.xpose.msra.mxu0 0.0
    %1213 = vmatprep.subr.mxu0 0.0
    %1214 = vmatpush1.xpose.msra.mxu0 0.0
    %1215 = vmatprep.subr.mxu0 0.0
    %1216 = vmatpush1.xpose.msra.mxu0 0.0
    %1217 = vmatprep.subr.mxu0 0.0
    %1218 = vmatpush1.xpose.msra.mxu0 0.0
    %1219 = vmatprep.subr.mxu0 0.0
    %1220 = vmatpush1.xpose.msra.mxu0 0.0
    %1221 = vmatprep.subr.mxu0 0.0
    %1222 = vmatpush1.xpose.msra.mxu0 0.0
    %1223 = vmatprep.subr.mxu0 0.0
    %1224 = vmatpush1.xpose.msra.mxu0 0.0
    %1225 = vmatprep.subr.mxu0 0.0
    %1226 = vmatpush1.xpose.msra.mxu0 0.0
    %1227 = vmatprep.subr.mxu0 0.0
    %1228 = vmatpush1.xpose.msra.mxu0 0.0
    %1229 = vmatprep.subr.mxu0 0.0
    %1230 = vmatpush1.xpose.msra.mxu0 0.0
    %1231 = vmatprep.subr.mxu0 0.0
    %1232 = vmatpush1.xpose.msra.mxu0 0.0
    %1233 = vmatprep.subr.mxu0 0.0
    %1234 = vmatpush1.xpose.msra.mxu0 0.0
    %1235 = vmatprep.subr.mxu0 0.0
    %1236 = vmatpush1.xpose.msra.mxu0 0.0
    %1237 = vmatprep.subr.mxu0 0.0
    %1238 = vmatpush1.xpose.msra.mxu0 0.0
    %1239 = vmatprep.subr.mxu0 0.0
    %1240 = vmatpush1.xpose.msra.mxu0 0.0
    %1241 = vmatprep.subr.mxu0 0.0
    %1242 = vmatpush1.xpose.msra.mxu0 0.0
    %1243 = vmatprep.subr.mxu0 0.0
    %1244 = vmatpush1.xpose.msra.mxu0 0.0
    %1245 = vmatprep.subr.mxu0 0.0
    %1246 = vmatpush1.xpose.msra.mxu0 0.0
    %1247 = vmatprep.subr.mxu0 0.0
    %1248 = vmatpush1.xpose.msra.mxu0 0.0
    %1249 = vmatprep.subr.mxu0 0.0
    %1250 = vmatpush1.xpose.msra.mxu0 0.0
    %1251 = vmatprep.subr.mxu0 0.0
    %1252 = vmatpush1.xpose.msra.mxu0 0.0
    %1253 = vmatprep.subr.mxu0 0.0
    %1254 = vmatpush1.xpose.msra.mxu0 0.0
    %1255 = vmatprep.subr.mxu0 0.0
    %1256 = vmatpush1.xpose.msra.mxu0 0.0
    %1257 = vmatprep.subr.mxu0 0.0
    %1258 = vmatpush1.xpose.msra.mxu0 0.0
    %1259 = vmatprep.mubr.f32.mxu0 0.0
    %1260 = vmatmul.mubr.f32.gmra.mrb[0].mxu0 %v1191
    %v1261 = vpop.f32.mrb[0].mxu0
    %v1262 = vadd.f32 0.0, %v1261
    %v1263 = vpop.f32.mrb[0].mxu0
    %1264 = vdwg.mxu0
    %v1265 = vmul.f32 %v1184, 0.35355338
    %v1266 = vmul.f32 %v1262, 0.35355338
    %v1267 = vsel %vm117, %v1265, -inf
    %1268 = vmax.xlane.f32.xlu0 %v1267
    %v1269 = vpop.xlane.xlu0 %1268
    %v1270 = vsel %vm117, %v1266, -inf
    %1271 = vmax.xlane.f32.xlu0 %v1270
    %v1272 = vpop.xlane.xlu0 %1271
    %v1273 = vsub.f32 %v1265, %v1269
    %v1274 = vsub.f32 %v1266, %v1272
    %v1275 = vmul.f32 %v1273, 1.442695
    %v1276 = vpow.pop %v1275
    %v1277 = vmul.f32 %v1274, 1.442695
    %v1278 = vpow.pop %v1277
    %v1279 = vsel %vm117, %v1276, 0.0
    %1280 = vadd.xlane.f32.xlu0 %v1279
    %v1281 = vpop.xlane.xlu0 %1280
    %v1282 = vsel %vm117, %v1278, 0.0
    %1283 = vadd.xlane.f32.xlu0 %v1282
    %v1284 = vpop.xlane.xlu0 %1283
    %v1285 = vrcp.pop %v1281
    %v1286 = vrcp.pop %v1284
    %v1287 = vmul.f32 %v1276, %v1285
    %v1288 = vmul.f32 %v1278, %v1286
    %1289 = vrot.lane.b32.xlu0 %v106, 40
    %v1290 = vpop.permute.xlu0 %1289
    %v1293 = vsel %vm117, %v1287, 0
    %1295 = vmatprep.subr.mxu0 0.0
    %1296 = vmatpush1.msra.mxu0 %v1290
    %1297 = vmatprep.subr.mxu0 0.0
    %1298 = vmatpush1.msra.mxu0 0.0
    %1299 = vmatprep.subr.mxu0 0.0
    %1300 = vmatpush1.msra.mxu0 0.0
    %1301 = vmatprep.subr.mxu0 0.0
    %1302 = vmatpush1.msra.mxu0 0.0
    %1303 = vmatprep.subr.mxu0 0.0
    %1304 = vmatpush1.msra.mxu0 0.0
    %1305 = vmatprep.subr.mxu0 0.0
    %1306 = vmatpush1.msra.mxu0 0.0
    %1307 = vmatprep.subr.mxu0 0.0
    %1308 = vmatpush1.msra.mxu0 0.0
    %1309 = vmatprep.subr.mxu0 0.0
    %1310 = vmatpush1.msra.mxu0 0.0
    %1311 = vmatprep.subr.mxu0 0.0
    %1312 = vmatpush1.msra.mxu0 0.0
    %1313 = vmatprep.subr.mxu0 0.0
    %1314 = vmatpush1.msra.mxu0 0.0
    %1315 = vmatprep.subr.mxu0 0.0
    %1316 = vmatpush1.msra.mxu0 0.0
    %1317 = vmatprep.subr.mxu0 0.0
    %1318 = vmatpush1.msra.mxu0 0.0
    %1319 = vmatprep.subr.mxu0 0.0
    %1320 = vmatpush1.msra.mxu0 0.0
    %1321 = vmatprep.subr.mxu0 0.0
    %1322 = vmatpush1.msra.mxu0 0.0
    %1323 = vmatprep.subr.mxu0 0.0
    %1324 = vmatpush1.msra.mxu0 0.0
    %1325 = vmatprep.subr.mxu0 0.0
    %1326 = vmatpush1.msra.mxu0 0.0
    %1327 = vmatprep.subr.mxu0 0.0
    %1328 = vmatpush1.msra.mxu0 0.0
    %1329 = vmatprep.subr.mxu0 0.0
    %1330 = vmatpush1.msra.mxu0 0.0
    %1331 = vmatprep.subr.mxu0 0.0
    %1332 = vmatpush1.msra.mxu0 0.0
    %1333 = vmatprep.subr.mxu0 0.0
    %1334 = vmatpush1.msra.mxu0 0.0
    %1335 = vmatprep.subr.mxu0 0.0
    %1336 = vmatpush1.msra.mxu0 0.0
    %1337 = vmatprep.subr.mxu0 0.0
    %1338 = vmatpush1.msra.mxu0 0.0
    %1339 = vmatprep.subr.mxu0 0.0
    %1340 = vmatpush1.msra.mxu0 0.0
    %1341 = vmatprep.subr.mxu0 0.0
    %1342 = vmatpush1.msra.mxu0 0.0
    %1343 = vmatprep.subr.mxu0 0.0
    %1344 = vmatpush1.msra.mxu0 0.0
    %1345 = vmatprep.subr.mxu0 0.0
    %1346 = vmatpush1.msra.mxu0 0.0
    %1347 = vmatprep.subr.mxu0 0.0
    %1348 = vmatpush1.msra.mxu0 0.0
    %1349 = vmatprep.subr.mxu0 0.0
    %1350 = vmatpush1.msra.mxu0 0.0
    %1351 = vmatprep.subr.mxu0 0.0
    %1352 = vmatpush1.msra.mxu0 0.0
    %1353 = vmatprep.subr.mxu0 0.0
    %1354 = vmatpush1.msra.mxu0 0.0
    %1355 = vmatprep.subr.mxu0 0.0
    %1356 = vmatpush1.msra.mxu0 0.0
    %1357 = vmatprep.subr.mxu0 0.0
    %1358 = vmatpush1.msra.mxu0 0.0
    %1359 = vmatprep.mubr.f32.mxu0 0.0
    %1360 = vmatmul.mubr.f32.gmra.mrb[0].mxu0 %v1293
    %v1361 = vpop.f32.mrb[0].mxu0
    %v1362 = vadd.f32 0.0, %v1361
    %v1363 = vpop.f32.mrb[0].mxu0
    %1364 = vdwg.mxu0
    %1365 = vrot.lane.b32.xlu0 %v111, 40
    %v1366 = vpop.permute.xlu0 %1365
    %v1369 = vsel %vm117, %v1288, 0
    %1371 = vmatprep.subr.mxu0 0.0
    %1372 = vmatpush1.msra.mxu0 %v1366
    %1373 = vmatprep.subr.mxu0 0.0
    %1374 = vmatpush1.msra.mxu0 0.0
    %1375 = vmatprep.subr.mxu0 0.0
    %1376 = vmatpush1.msra.mxu0 0.0
    %1377 = vmatprep.subr.mxu0 0.0
    %1378 = vmatpush1.msra.mxu0 0.0
    %1379 = vmatprep.subr.mxu0 0.0
    %1380 = vmatpush1.msra.mxu0 0.0
    %1381 = vmatprep.subr.mxu0 0.0
    %1382 = vmatpush1.msra.mxu0 0.0
    %1383 = vmatprep.subr.mxu0 0.0
    %1384 = vmatpush1.msra.mxu0 0.0
    %1385 = vmatprep.subr.mxu0 0.0
    %1386 = vmatpush1.msra.mxu0 0.0
    %1387 = vmatprep.subr.mxu0 0.0
    %1388 = vmatpush1.msra.mxu0 0.0
    %1389 = vmatprep.subr.mxu0 0.0
    %1390 = vmatpush1.msra.mxu0 0.0
    %1391 = vmatprep.subr.mxu0 0.0
    %1392 = vmatpush1.msra.mxu0 0.0
    %1393 = vmatprep.subr.mxu0 0.0
    %1394 = vmatpush1.msra.mxu0 0.0
    %1395 = vmatprep.subr.mxu0 0.0
    %1396 = vmatpush1.msra.mxu0 0.0
    %1397 = vmatprep.subr.mxu0 0.0
    %1398 = vmatpush1.msra.mxu0 0.0
    %1399 = vmatprep.subr.mxu0 0.0
    %1400 = vmatpush1.msra.mxu0 0.0
    %1401 = vmatprep.subr.mxu0 0.0
    %1402 = vmatpush1.msra.mxu0 0.0
    %1403 = vmatprep.subr.mxu0 0.0
    %1404 = vmatpush1.msra.mxu0 0.0
    %1405 = vmatprep.subr.mxu0 0.0
    %1406 = vmatpush1.msra.mxu0 0.0
    %1407 = vmatprep.subr.mxu0 0.0
    %1408 = vmatpush1.msra.mxu0 0.0
    %1409 = vmatprep.subr.mxu0 0.0
    %1410 = vmatpush1.msra.mxu0 0.0
    %1411 = vmatprep.subr.mxu0 0.0
    %1412 = vmatpush1.msra.mxu0 0.0
    %1413 = vmatprep.subr.mxu0 0.0
    %1414 = vmatpush1.msra.mxu0 0.0
    %1415 = vmatprep.subr.mxu0 0.0
    %1416 = vmatpush1.msra.mxu0 0.0
    %1417 = vmatprep.subr.mxu0 0.0
    %1418 = vmatpush1.msra.mxu0 0.0
    %1419 = vmatprep.subr.mxu0 0.0
    %1420 = vmatpush1.msra.mxu0 0.0
    %1421 = vmatprep.subr.mxu0 0.0
    %1422 = vmatpush1.msra.mxu0 0.0
    %1423 = vmatprep.subr.mxu0 0.0
    %1424 = vmatpush1.msra.mxu0 0.0
    %1425 = vmatprep.subr.mxu0 0.0
    %1426 = vmatpush1.msra.mxu0 0.0
    %1427 = vmatprep.subr.mxu0 0.0
    %1428 = vmatpush1.msra.mxu0 0.0
    %1429 = vmatprep.subr.mxu0 0.0
    %1430 = vmatpush1.msra.mxu0 0.0
    %1431 = vmatprep.subr.mxu0 0.0
    %1432 = vmatpush1.msra.mxu0 0.0
    %1433 = vmatprep.subr.mxu0 0.0
    %1434 = vmatpush1.msra.mxu0 0.0
    %1435 = vmatprep.mubr.f32.mxu0 0.0
    %1436 = vmatmul.mubr.f32.gmra.mrb[0].mxu0 %v1369
    %v1437 = vpop.f32.mrb[0].mxu0
    %v1438 = vadd.f32 0.0, %v1437
    %v1439 = vpop.f32.mrb[0].mxu0
    %1440 = vdwg.mxu0
    %1443 = vrot.lane.b32.xlu0 %v698, 8
    %v1444 = vpop.permute.xlu0 %1443
    %1445 = vrot.lane.b32.xlu0 %v774, 8
    %v1446 = vpop.permute.xlu0 %1445
    %1451 = vrot.lane.b32.xlu0 %v1030, 16
    %v1452 = vpop.permute.xlu0 %1451
    %1453 = vrot.lane.b32.xlu0 %v1106, 16
    %v1454 = vpop.permute.xlu0 %1453
    %1459 = vrot.lane.b32.xlu0 %v1362, 24
    %v1460 = vpop.permute.xlu0 %1459
    %1461 = vrot.lane.b32.xlu0 %v1438, 24
    %v1462 = vpop.permute.xlu0 %1461
    %v1465 = vsel %vm117, %v366, %v1444
    %v1466 = vsel %vm117, %v442, %v1446
    %v1467 = vsel %vm32, %v1465, %v1452
    %v1468 = vsel %vm32, %v1466, %v1454
    %vm1469 = vcmask 195584
    %v1470 = vsel %vm1469, %v1467, %v1460
    %v1471 = vsel %vm1469, %v1468, %v1462
    %v1472 = vld [vmem:[%s3] sm:$0xff]
    %v1473 = vld [vmem:[%s3 + $0x8] sm:$0xff]
    %v1474 = vld [vmem:[%s3 + $0x10] sm:$0xff]
    %v1475 = vld [vmem:[%s3 + $0x18] sm:$0xff]
    %v1476 = vld [vmem:[%s4] sm:$0x1]
    %v1478 = vlaneseq
    %v1479 = vshrl.u32 %v1478, 7
    %v1480 = vsub.s32 0, %v1479
    %v1481 = vrot.slane %v1476, %v1480
    %vm1483 = vcmask 261120
    %v1485 = vsel %vm1483, %v1470, 0
    %v1488 = vsel %vm1483, %v1471, 0
    %1490 = vmatprep.subr.mxu0 0.0
    %1491 = vmatpush1.msra.mxu0 %v1472
    %1492 = vmatprep.subr.mxu0 0.0
    %1493 = vmatpush1.msra.mxu0 %v1473
    %1494 = vmatprep.subr.mxu0 0.0
    %1495 = vmatpush1.msra.mxu0 %v1474
    %1496 = vmatprep.subr.mxu0 0.0
    %1497 = vmatpush1.msra.mxu0 %v1475
    %1498 = vmatprep.subr.mxu0 0.0
    %1499 = vmatpush1.msra.mxu0 0.0
    %1500 = vmatprep.subr.mxu0 0.0
    %1501 = vmatpush1.msra.mxu0 0.0
    %1502 = vmatprep.subr.mxu0 0.0
    %1503 = vmatpush1.msra.mxu0 0.0
    %1504 = vmatprep.subr.mxu0 0.0
    %1505 = vmatpush1.msra.mxu0 0.0
    %1506 = vmatprep.subr.mxu0 0.0
    %1507 = vmatpush1.msra.mxu0 0.0
    %1508 = vmatprep.subr.mxu0 0.0
    %1509 = vmatpush1.msra.mxu0 0.0
    %1510 = vmatprep.subr.mxu0 0.0
    %1511 = vmatpush1.msra.mxu0 0.0
    %1512 = vmatprep.subr.mxu0 0.0
    %1513 = vmatpush1.msra.mxu0 0.0
    %1514 = vmatprep.subr.mxu0 0.0
    %1515 = vmatpush1.msra.mxu0 0.0
    %1516 = vmatprep.subr.mxu0 0.0
    %1517 = vmatpush1.msra.mxu0 0.0
    %1518 = vmatprep.subr.mxu0 0.0
    %1519 = vmatpush1.msra.mxu0 0.0
    %1520 = vmatprep.subr.mxu0 0.0
    %1521 = vmatpush1.msra.mxu0 0.0
    %1522 = vmatprep.subr.mxu0 0.0
    %1523 = vmatpush1.msra.mxu0 0.0
    %1524 = vmatprep.subr.mxu0 0.0
    %1525 = vmatpush1.msra.mxu0 0.0
    %1526 = vmatprep.subr.mxu0 0.0
    %1527 = vmatpush1.msra.mxu0 0.0
    %1528 = vmatprep.subr.mxu0 0.0
    %1529 = vmatpush1.msra.mxu0 0.0
    %1530 = vmatprep.subr.mxu0 0.0
    %1531 = vmatpush1.msra.mxu0 0.0
    %1532 = vmatprep.subr.mxu0 0.0
    %1533 = vmatpush1.msra.mxu0 0.0
    %1534 = vmatprep.subr.mxu0 0.0
    %1535 = vmatpush1.msra.mxu0 0.0
    %1536 = vmatprep.subr.mxu0 0.0
    %1537 = vmatpush1.msra.mxu0 0.0
    %1538 = vmatprep.subr.mxu0 0.0
    %1539 = vmatpush1.msra.mxu0 0.0
    %1540 = vmatprep.subr.mxu0 0.0
    %1541 = vmatpush1.msra.mxu0 0.0
    %1542 = vmatprep.subr.mxu0 0.0
    %1543 = vmatpush1.msra.mxu0 0.0
    %1544 = vmatprep.subr.mxu0 0.0
    %1545 = vmatpush1.msra.mxu0 0.0
    %1546 = vmatprep.subr.mxu0 0.0
    %1547 = vmatpush1.msra.mxu0 0.0
    %1548 = vmatprep.subr.mxu0 0.0
    %1549 = vmatpush1.msra.mxu0 0.0
    %1550 = vmatprep.subr.mxu0 0.0
    %1551 = vmatpush1.msra.mxu0 0.0
    %1552 = vmatprep.subr.mxu0 0.0
    %1553 = vmatpush1.msra.mxu0 0.0
    %1554 = vmatprep.mubr.f32.mxu0 0.0
    %1555 = vmatmul.mubr.f32.gmra.mrb[0].mxu0 %v1485
    %v1556 = vpop.f32.mrb[0].mxu0
    %v1557 = vadd.f32 %v1481, %v1556
    %v1558 = vpop.f32.mrb[0].mxu0
    %1559 = vmatprep.mubr.f32.mxu0 0.0
    %1560 = vmatmul.mubr.f32.gmra.mrb[0].mxu0 %v1488
    %v1561 = vpop.f32.mrb[0].mxu0
    %v1562 = vadd.f32 %v1481, %v1561
    %v1563 = vpop.f32.mrb[0].mxu0
    %1564 = vdwg.mxu0
    %1565 = vst.msk [vmem:[#allocation2] sm:$0xff] %vm32, %v1557
    %1566 = vst.msk [vmem:[#allocation2 + $0x8] sm:$0xff] %vm32, %v1562
    // Predicated region
    $region22: #{tpu_custom_call.1} parent=1 // pred_check
      _
    $region23: #{tpu_custom_call.1} parent=1 // pred_check_branch
      %1568 = sbr.rel (0) target = $region25
    $region24: #{tpu_custom_call.1} parent=1 // pred_region
      %s1570 = ssub.s32 256, 256
      %1571 = vsyncadd [#allocation3], %s1570
      %s1572 = sshll.u32 [#allocation2], 4
      %s1573 = int_to_ptr.vmem [resolvable:$true] %s1572
      %1578 = dma.vmem_to_hbm [thread:$0]  %s1573, 256, %s5, [#allocation3], 128, 128, 8
    $region25: #{tpu_custom_call.1} parent=1 // pred_fallthru
      _
    // Predicated region
    $region26: #{tpu_custom_call.1} parent=1 // pred_check
      _
    $region27: #{tpu_custom_call.1} parent=1 // pred_check_branch
      %1580 = sbr.rel (0) target = $region29
    $region28: #{tpu_custom_call.1} parent=1 // pred_region
      %1581 = dma.done [#allocation3], 256
    $region29: #{tpu_custom_call.1} parent=1 // pred_fallthru
      _
    %1582 = vsyncpa [#allocation3], 1

</llo_original>
